<compile_context>
chip_gen: v5e
topology: v5e:2x2
jax: 0.10.0
libtpu: 0.0.40
codegen_flags: <defaults>
</compile_context>

<pallas_src>
import functools

import jax
import jax.numpy as jnp
from jax.experimental import pallas as pl
from jax.experimental.pallas import tpu as pltpu

BN_EPS = 1e-5
_VMEM_LIMIT_BYTES = 48 * 1024 * 1024   # safe on v5e/v6e (128 MiB) and v7x (64 MiB)


def _choose_pixel_tile(hw):
    # Largest lane-aligned tile (<=2048 so it also fits v7x VMEM) dividing H*W.
    for t in (2048, 1024, 512, 256, 128):
        if hw % t == 0:
            return t
    return hw   # fall back to the full spatial extent (block == full dim is legal)


# ---------------------------------------------------------------------------
# Pass 1: batch statistics of y_g = Wg@g + bg and y_x = Wx@x + bx
#         accumulated across every (batch, pixel-tile) grid step.
# ---------------------------------------------------------------------------
def _stats_kernel(g_ref, x_ref, wg_ref, wx_ref, bg_ref, bx_ref,
                  sum_g_ref, sqr_g_ref, sum_x_ref, sqr_x_ref):
    @pl.when((pl.program_id(0) == 0) & (pl.program_id(1) == 0))
    def _init():
        sum_g_ref[...] = jnp.zeros_like(sum_g_ref)
        sqr_g_ref[...] = jnp.zeros_like(sqr_g_ref)
        sum_x_ref[...] = jnp.zeros_like(sum_x_ref)
        sqr_x_ref[...] = jnp.zeros_like(sqr_x_ref)

    # (F_int, C) @ (C, T) on the MXU, f32 accumulation; bias add in f32.
    y_g = jnp.dot(wg_ref[...], g_ref[0], preferred_element_type=jnp.float32) + bg_ref[...]
    y_x = jnp.dot(wx_ref[...], x_ref[0], preferred_element_type=jnp.float32) + bx_ref[...]

    sum_g_ref[...] += jnp.sum(y_g, axis=1, keepdims=True)
    sqr_g_ref[...] += jnp.sum(y_g * y_g, axis=1, keepdims=True)
    sum_x_ref[...] += jnp.sum(y_x, axis=1, keepdims=True)
    sqr_x_ref[...] += jnp.sum(y_x * y_x, axis=1, keepdims=True)


# ---------------------------------------------------------------------------
# Pass 2: p = psi_conv( relu( BN(Wg g) + BN(Wx x) ) ), written as a lane-dense
#         (1, T) row per tile.  BN is applied as a pre-folded per-channel affine.
# ---------------------------------------------------------------------------
def _gate_kernel(g_ref, x_ref, wg_ref, wx_ref, bg_ref, bx_ref,
                 scale_g_ref, shift_g_ref, scale_x_ref, shift_x_ref,
                 wp_ref, bp_ref, p_ref):
    y_g = jnp.dot(wg_ref[...], g_ref[0], preferred_element_type=jnp.float32) + bg_ref[...]
    y_x = jnp.dot(wx_ref[...], x_ref[0], preferred_element_type=jnp.float32) + bx_ref[...]
    g1 = y_g * scale_g_ref[...] + shift_g_ref[...]          # f32 BN affine
    x1 = y_x * scale_x_ref[...] + shift_x_ref[...]
    s = jnp.maximum(g1 + x1, 0.0)                            # ReLU
    # psi 1x1 conv (F_int -> 1): VPU multiply + cross-sublane reduce instead of a
    # width-1 MXU matmul; result stays lane-dense.
    p_ref[0] = jnp.sum(s * wp_ref[...], axis=0, keepdims=True) + bp_ref[...]


# ---------------------------------------------------------------------------
# Pass 3: psi = sigmoid(BN(p));  out = x * psi   (lane-dense tiles, parallel grid)
# ---------------------------------------------------------------------------
def _apply_kernel(x_ref, p_ref, aff_ref, out_ref):
    aff = aff_ref[...]                    # (1, 2) f32 = [scale_p, shift_p]
    scale = aff[:, 0:1]
    shift = aff[:, 1:2]
    psi = jax.nn.sigmoid(p_ref[0] * scale + shift)                     # (1, T)
    out_ref[0] = (x_ref[0].astype(jnp.float32) * psi).astype(out_ref.dtype)


# ---------------------------------------------------------------------------
# Wrapper
# ---------------------------------------------------------------------------
def attention_block(g, x, params, *, pixel_tile=None, matmul_dtype=None):
    """g: (N, F_g, H, W), x: (N, F_l, H, W) -> (N, F_l, H, W)."""
    N, Cg, H, W = g.shape
    Nx, Cl, Hx, Wx = x.shape
    assert (N, H, W) == (Nx, Hx, Wx)
    HW = H * W
    P = N * HW
    f32 = jnp.float32

    T = int(pixel_tile) if pixel_tile is not None else _choose_pixel_tile(HW)
    assert HW % T == 0, "pixel_tile must divide H*W"
    grid = (N, HW // T)

    F_int = params["wg"].shape[0]
    cdt = matmul_dtype if matmul_dtype is not None else g.dtype

    # NCHW -> (N, C, H*W): trailing-dim merge only => no data movement; pixels land
    # on the lane (last) axis.
    g_c = g.reshape(N, Cg, HW).astype(cdt)
    x_c = x.reshape(N, Cl, HW).astype(cdt)
    x_full = x.reshape(N, Cl, HW)          # original dtype for the final gating pass

    wg_c = params["wg"].astype(cdt)        # (F_int, F_g)  == Conv2d weight squeezed
    wx_c = params["wx"].astype(cdt)        # (F_int, F_l)
    bg = params["bg"].reshape(F_int, 1).astype(f32)
    bx = params["bx"].reshape(F_int, 1).astype(f32)
    gam_g = params["gg"].reshape(F_int, 1).astype(f32)
    bet_g = params["betg"].reshape(F_int, 1).astype(f32)
    gam_x = params["gx"].reshape(F_int, 1).astype(f32)
    bet_x = params["betx"].reshape(F_int, 1).astype(f32)
    wp = params["wp"].reshape(F_int, 1).astype(f32)   # psi conv weight as a column
    bp = params["bp"].reshape(1, 1).astype(f32)

    def tile_spec(c):                      # streamed (1, C, T) pixel tiles
        return pl.BlockSpec((1, c, T), lambda n, t: (n, 0, t))

    def const_spec(shape):                 # resident params: constant block index
        return pl.BlockSpec(tuple(shape), lambda n, t: (0,) * len(shape))

    def cparams(sem):
        return pltpu.CompilerParams(dimension_semantics=sem,
                                    vmem_limit_bytes=_VMEM_LIMIT_BYTES)

    # ---- pass 1: exact batch statistics (accumulated across all tiles) --------
    stat = jax.ShapeDtypeStruct((F_int, 1), f32)
    sum_g, sqr_g, sum_x, sqr_x = pl.pallas_call(
        _stats_kernel,
        grid=grid,
        in_specs=[tile_spec(Cg), tile_spec(Cl),
                  const_spec(wg_c.shape), const_spec(wx_c.shape),
                  const_spec(bg.shape), const_spec(bx.shape)],
        out_specs=[const_spec((F_int, 1)) for _ in range(4)],
        out_shape=[stat for _ in range(4)],
        compiler_params=cparams(("arbitrary", "arbitrary")),
    )(g_c, x_c, wg_c, wx_c, bg, bx)

    # Fold BN(train) into per-channel affine: y*scale + shift  (tiny, plain XLA).
    inv_p = 1.0 / P
    mean_g = sum_g * inv_p
    var_g = jnp.maximum(sqr_g * inv_p - mean_g * mean_g, 0.0)
    scale_g = gam_g * jax.lax.rsqrt(var_g + BN_EPS)
    shift_g = bet_g - mean_g * scale_g
    mean_x = sum_x * inv_p
    var_x = jnp.maximum(sqr_x * inv_p - mean_x * mean_x, 0.0)
    scale_x = gam_x * jax.lax.rsqrt(var_x + BN_EPS)
    shift_x = bet_x - mean_x * scale_x

    # ---- pass 2: gate pre-activation p (lane-dense (N,1,HW) map) --------------
    p_raw = pl.pallas_call(
        _gate_kernel,
        grid=grid,
        in_specs=[tile_spec(Cg), tile_spec(Cl),
                  const_spec(wg_c.shape), const_spec(wx_c.shape),
                  const_spec(bg.shape), const_spec(bx.shape),
                  const_spec((F_int, 1)), const_spec((F_int, 1)),
                  const_spec((F_int, 1)), const_spec((F_int, 1)),
                  const_spec((F_int, 1)), const_spec((1, 1))],
        out_specs=pl.BlockSpec((1, 1, T), lambda n, t: (n, 0, t)),
        out_shape=jax.ShapeDtypeStruct((N, 1, HW), f32),
        compiler_params=cparams(("parallel", "parallel")),
    )(g_c, x_c, wg_c, wx_c, bg, bx, scale_g, shift_g, scale_x, shift_x, wp, bp)

    # psi BatchNorm has a single channel: batch stats are a trivial reduction over
    # the tiny p map -- done in plain XLA between the two kernels.
    mean_p = jnp.mean(p_raw)
    var_p = jnp.maximum(jnp.mean(p_raw * p_raw) - mean_p * mean_p, 0.0)
    gam_p = params["gp"].reshape(()).astype(f32)
    bet_p = params["betp"].reshape(()).astype(f32)
    scale_p = gam_p * jax.lax.rsqrt(var_p + BN_EPS)
    shift_p = bet_p - mean_p * scale_p
    psi_aff = jnp.stack([scale_p, shift_p]).reshape(1, 2).astype(f32)

    # ---- pass 3: out = x * sigmoid(BN(p)) --------------------------------------
    out3 = pl.pallas_call(
        _apply_kernel,
        grid=grid,
        in_specs=[tile_spec(Cl),
                  pl.BlockSpec((1, 1, T), lambda n, t: (n, 0, t)),
                  const_spec((1, 2))],
        out_specs=tile_spec(Cl),
        out_shape=jax.ShapeDtypeStruct((N, Cl, HW), x.dtype),
        compiler_params=cparams(("parallel", "parallel")),
    )(x_full, p_raw, psi_aff)

    return out3.reshape(N, Cl, H, W)


# ---------------------------------------------------------------------------
# Pure-JAX reference (PyTorch Attention_block forward, BN in training mode)
# ---------------------------------------------------------------------------
def attention_block_ref(g, x, params, *, matmul_dtype=None):
    N, Cg, H, W = g.shape
    _, Cl, _, _ = x.shape
    HW = H * W
    f32 = jnp.float32
    cdt = matmul_dtype if matmul_dtype is not None else g.dtype
    hi = jax.lax.Precision.HIGHEST

    def conv1x1(inp, w, b):
        y = jnp.einsum("oc,ncp->nop", w.astype(cdt), inp.astype(cdt),
                       precision=hi, preferred_element_type=f32)
        return y + b.astype(f32)[None, :, None]

    def bn_train(y, gamma, beta):
        mu = jnp.mean(y, axis=(0, 2), keepdims=True)
        var = jnp.maximum(jnp.mean(y * y, axis=(0, 2), keepdims=True) - mu * mu, 0.0)
        return (y - mu) * (gamma.astype(f32)[None, :, None] * jax.lax.rsqrt(var + BN_EPS)) \
            + beta.astype(f32)[None, :, None]

    gf = g.reshape(N, Cg, HW)
    xf = x.reshape(N, Cl, HW)
    g1 = bn_train(conv1x1(gf, params["wg"], params["bg"]), params["gg"], params["betg"])
    x1 = bn_train(conv1x1(xf, params["wx"], params["bx"]), params["gx"], params["betx"])
    s = jnp.maximum(g1 + x1, 0.0)
    p = jnp.einsum("oc,ncp->nop", params["wp"].astype(f32), s,
                   precision=hi, preferred_element_type=f32) \
        + params["bp"].astype(f32)[None, :, None]
    psi = jax.nn.sigmoid(bn_train(p, params["gp"], params["betp"]))
    out = (xf.astype(f32) * psi).astype(x.dtype)
    return out.reshape(N, Cl, H, W)


def init_params(key, F_g, F_l, F_int):
    ks = jax.random.split(key, 6)
    f32 = jnp.float32
    return dict(
        # Conv2d(kernel_size=1) weights (Cout, Cin, 1, 1) squeezed to (Cout, Cin).
        wg=0.2 * jax.random.normal(ks[0], (F_int, F_g), f32),
        wx=0.2 * jax.random.normal(ks[1], (F_int, F_l), f32),
        wp=0.2 * jax.random.normal(ks[2], (1, F_int), f32),
        bg=0.1 * jax.random.normal(ks[3], (F_int,), f32),
        bx=0.1 * jax.random.normal(ks[4], (F_int,), f32),
        bp=0.1 * jax.random.normal(ks[5], (1,), f32),
        # BatchNorm affine params at PyTorch defaults (gamma=1, beta=0).
        gg=jnp.ones((F_int,), f32), betg=jnp.zeros((F_int,), f32),
        gx=jnp.ones((F_int,), f32), betx=jnp.zeros((F_int,), f32),
        gp=jnp.ones((1,), f32), betp=jnp.zeros((1,), f32),
    )


if __name__ == "__main__":
    F_g, F_l, F_int = 4, 4, 8
    N, H, W = 2, 16, 16

    key = jax.random.PRNGKey(0)
    kg, kx, kp = jax.random.split(key, 3)
    g = jax.random.normal(kg, (N, F_g, H, W), jnp.float32)
    x = jax.random.normal(kx, (N, F_l, H, W), jnp.float32)
    params = init_params(kp, F_g, F_l, F_int)

    # f32 run (exact module semantics); pixel_tile=128 -> grid (2, 2) so the
    # cross-tile BN-statistics accumulation is actually exercised.
    fwd = jax.jit(functools.partial(attention_block, pixel_tile=128))
    out = jax.block_until_ready(fwd(g, x, params))
    ref = attention_block_ref(g, x, params)
    assert out.shape == (N, F_l, H, W)
    assert jnp.allclose(out, ref, atol=1e-4, rtol=1e-4), "f32 mismatch vs reference"

    # bf16 matmul-operand run (bandwidth option for bf16-producing networks),
    # checked against a reference using the same operand precision.
    fwd_bf16 = jax.jit(functools.partial(attention_block, pixel_tile=128,
                                         matmul_dtype=jnp.bfloat16))
    out_bf = jax.block_until_ready(fwd_bf16(g, x, params))
    ref_bf = attention_block_ref(g, x, params, matmul_dtype=jnp.bfloat16)
    assert jnp.allclose(out_bf, ref_bf, atol=5e-3, rtol=5e-3), "bf16 mismatch vs reference"

    print("KERNEL_OK")
</pallas_src>

<mosaic_0001>
module attributes {stable_mosaic.version = 11 : i64} {
  func.func @_gate_kernel(%arg0: i32, %arg1: i32, %arg2: memref<1x4x128xf32, #tpu.memory_space<vmem>>, %arg3: memref<1x4x128xf32, #tpu.memory_space<vmem>>, %arg4: memref<8x4xf32, #tpu.memory_space<vmem>>, %arg5: memref<8x4xf32, #tpu.memory_space<vmem>>, %arg6: memref<8x1xf32, #tpu.memory_space<vmem>>, %arg7: memref<8x1xf32, #tpu.memory_space<vmem>>, %arg8: memref<8x1xf32, #tpu.memory_space<vmem>>, %arg9: memref<8x1xf32, #tpu.memory_space<vmem>>, %arg10: memref<8x1xf32, #tpu.memory_space<vmem>>, %arg11: memref<8x1xf32, #tpu.memory_space<vmem>>, %arg12: memref<8x1xf32, #tpu.memory_space<vmem>>, %arg13: memref<1x1xf32, #tpu.memory_space<vmem>>, %arg14: memref<1x1x128xf32, #tpu.memory_space<vmem>>) attributes {dimension_semantics = [#tpu.dimension_semantics<parallel>, #tpu.dimension_semantics<parallel>], iteration_bounds = array<i64: 2, 2>, scalar_prefetch = 0 : i64, scratch_operands = 0 : i64, tpu.core_type = #tpu.core_type<tc>, window_params = [{transform_indices = @transform_0, window_bounds = array<i64: 1, 4, 128>}, {transform_indices = @transform_1, window_bounds = array<i64: 1, 4, 128>}, {pipeline_mode = #tpu.pipeline_mode<synchronous>, transform_indices = @transform_2, window_bounds = array<i64: 8, 4>}, {pipeline_mode = #tpu.pipeline_mode<synchronous>, transform_indices = @transform_3, window_bounds = array<i64: 8, 4>}, {pipeline_mode = #tpu.pipeline_mode<synchronous>, transform_indices = @transform_4, window_bounds = array<i64: 8, 1>}, {pipeline_mode = #tpu.pipeline_mode<synchronous>, transform_indices = @transform_5, window_bounds = array<i64: 8, 1>}, {pipeline_mode = #tpu.pipeline_mode<synchronous>, transform_indices = @transform_6, window_bounds = array<i64: 8, 1>}, {pipeline_mode = #tpu.pipeline_mode<synchronous>, transform_indices = @transform_7, window_bounds = array<i64: 8, 1>}, {pipeline_mode = #tpu.pipeline_mode<synchronous>, transform_indices = @transform_8, window_bounds = array<i64: 8, 1>}, {pipeline_mode = #tpu.pipeline_mode<synchronous>, transform_indices = @transform_9, window_bounds = array<i64: 8, 1>}, {pipeline_mode = #tpu.pipeline_mode<synchronous>, transform_indices = @transform_10, window_bounds = array<i64: 8, 1>}, {pipeline_mode = #tpu.pipeline_mode<synchronous>, transform_indices = @transform_11, window_bounds = array<i64: 1, 1>}, {transform_indices = @transform_12, window_bounds = array<i64: 1, 1, 128>}]} {
    %c0 = arith.constant 0 : index
    %c0_0 = arith.constant 0 : index
    %0 = vector.load %arg4[%c0, %c0_0] : memref<8x4xf32, #tpu.memory_space<vmem>>, vector<8x4xf32>
    %c0_1 = arith.constant 0 : index
    %c0_2 = arith.constant 0 : index
    %c0_3 = arith.constant 0 : index
    %1 = vector.load %arg2[%c0_1, %c0_2, %c0_3] : memref<1x4x128xf32, #tpu.memory_space<vmem>>, vector<1x4x128xf32>
    %2 = vector.shape_cast %1 : vector<1x4x128xf32> to vector<4x128xf32>
    %cst = arith.constant dense<0.000000e+00> : vector<8x128xf32>
    %3 = tpu.matmul %0, %2, %cst {dimension_numbers = #tpu.dot_dimension_numbers<[1], [0], [0], [1], [0, 0, 1, 1], [], []>} : vector<8x4xf32>, vector<4x128xf32>, vector<8x128xf32> -> vector<8x128xf32>
    %c0_4 = arith.constant 0 : index
    %c0_5 = arith.constant 0 : index
    %4 = vector.load %arg6[%c0_4, %c0_5] : memref<8x1xf32, #tpu.memory_space<vmem>>, vector<8x1xf32>
    %5 = vector.broadcast %4 : vector<8x1xf32> to vector<8x128xf32>
    %6 = arith.addf %3, %5 : vector<8x128xf32>
    %c0_6 = arith.constant 0 : index
    %c0_7 = arith.constant 0 : index
    %7 = vector.load %arg5[%c0_6, %c0_7] : memref<8x4xf32, #tpu.memory_space<vmem>>, vector<8x4xf32>
    %c0_8 = arith.constant 0 : index
    %c0_9 = arith.constant 0 : index
    %c0_10 = arith.constant 0 : index
    %8 = vector.load %arg3[%c0_8, %c0_9, %c0_10] : memref<1x4x128xf32, #tpu.memory_space<vmem>>, vector<1x4x128xf32>
    %9 = vector.shape_cast %8 : vector<1x4x128xf32> to vector<4x128xf32>
    %cst_11 = arith.constant dense<0.000000e+00> : vector<8x128xf32>
    %10 = tpu.matmul %7, %9, %cst_11 {dimension_numbers = #tpu.dot_dimension_numbers<[1], [0], [0], [1], [0, 0, 1, 1], [], []>} : vector<8x4xf32>, vector<4x128xf32>, vector<8x128xf32> -> vector<8x128xf32>
    %c0_12 = arith.constant 0 : index
    %c0_13 = arith.constant 0 : index
    %11 = vector.load %arg7[%c0_12, %c0_13] : memref<8x1xf32, #tpu.memory_space<vmem>>, vector<8x1xf32>
    %12 = vector.broadcast %11 : vector<8x1xf32> to vector<8x128xf32>
    %13 = arith.addf %10, %12 : vector<8x128xf32>
    %c0_14 = arith.constant 0 : index
    %c0_15 = arith.constant 0 : index
    %14 = vector.load %arg8[%c0_14, %c0_15] : memref<8x1xf32, #tpu.memory_space<vmem>>, vector<8x1xf32>
    %15 = vector.broadcast %14 : vector<8x1xf32> to vector<8x128xf32>
    %16 = arith.mulf %6, %15 : vector<8x128xf32>
    %c0_16 = arith.constant 0 : index
    %c0_17 = arith.constant 0 : index
    %17 = vector.load %arg9[%c0_16, %c0_17] : memref<8x1xf32, #tpu.memory_space<vmem>>, vector<8x1xf32>
    %18 = vector.broadcast %17 : vector<8x1xf32> to vector<8x128xf32>
    %19 = arith.addf %16, %18 : vector<8x128xf32>
    %c0_18 = arith.constant 0 : index
    %c0_19 = arith.constant 0 : index
    %20 = vector.load %arg10[%c0_18, %c0_19] : memref<8x1xf32, #tpu.memory_space<vmem>>, vector<8x1xf32>
    %21 = vector.broadcast %20 : vector<8x1xf32> to vector<8x128xf32>
    %22 = arith.mulf %13, %21 : vector<8x128xf32>
    %c0_20 = arith.constant 0 : index
    %c0_21 = arith.constant 0 : index
    %23 = vector.load %arg11[%c0_20, %c0_21] : memref<8x1xf32, #tpu.memory_space<vmem>>, vector<8x1xf32>
    %24 = vector.broadcast %23 : vector<8x1xf32> to vector<8x128xf32>
    %25 = arith.addf %22, %24 : vector<8x128xf32>
    %26 = arith.addf %19, %25 : vector<8x128xf32>
    %cst_22 = arith.constant 0.000000e+00 : f32
    %27 = vector.broadcast %cst_22 : f32 to vector<8x128xf32>
    %28 = arith.maximumf %26, %27 : vector<8x128xf32>
    %c0_23 = arith.constant 0 : index
    %c0_24 = arith.constant 0 : index
    %29 = vector.load %arg12[%c0_23, %c0_24] : memref<8x1xf32, #tpu.memory_space<vmem>>, vector<8x1xf32>
    %30 = vector.broadcast %29 : vector<8x1xf32> to vector<8x128xf32>
    %31 = arith.mulf %28, %30 : vector<8x128xf32>
    %cst_25 = arith.constant dense<0.000000e+00> : vector<128xf32>
    %32 = vector.multi_reduction <add>, %31, %cst_25 [0] : vector<8x128xf32> to vector<128xf32>
    %33 = vector.shape_cast %32 : vector<128xf32> to vector<1x128xf32>
    %c0_26 = arith.constant 0 : index
    %c0_27 = arith.constant 0 : index
    %34 = vector.load %arg13[%c0_26, %c0_27] : memref<1x1xf32, #tpu.memory_space<vmem>>, vector<1x1xf32>
    %35 = vector.broadcast %34 : vector<1x1xf32> to vector<1x128xf32>
    %36 = arith.addf %33, %35 : vector<1x128xf32>
    %c0_28 = arith.constant 0 : index
    %c0_29 = arith.constant 0 : index
    %c0_30 = arith.constant 0 : index
    %37 = vector.load %arg14[%c0_28, %c0_29, %c0_30] : memref<1x1x128xf32, #tpu.memory_space<vmem>>, vector<1x1x128xf32>
    %38 = vector.shape_cast %37 : vector<1x1x128xf32> to vector<1x128xf32>
    %39 = vector.shape_cast %36 : vector<1x128xf32> to vector<1x1x128xf32>
    tpu.vector_store %arg14[%c0_28, %c0_29, %c0_30], %39 {strides = array<i32>} : memref<1x1x128xf32, #tpu.memory_space<vmem>>, vector<1x1x128xf32>,
    return
  }
  func.func @transform_0(%arg0: i32, %arg1: i32) -> (i32, i32, i32) {
    %c0_i32 = arith.constant 0 : i32
    %c0_i32_0 = arith.constant 0 : i32
    return %arg0, %c0_i32, %arg1 : i32, i32, i32
  }
  func.func @transform_1(%arg0: i32, %arg1: i32) -> (i32, i32, i32) {
    %c0_i32 = arith.constant 0 : i32
    %c0_i32_0 = arith.constant 0 : i32
    return %arg0, %c0_i32, %arg1 : i32, i32, i32
  }
  func.func @transform_2(%arg0: i32, %arg1: i32) -> (i32, i32) {
    %c0_i32 = arith.constant 0 : i32
    %c0_i32_0 = arith.constant 0 : i32
    %c0_i32_1 = arith.constant 0 : i32
    return %c0_i32, %c0_i32_0 : i32, i32
  }
  func.func @transform_3(%arg0: i32, %arg1: i32) -> (i32, i32) {
    %c0_i32 = arith.constant 0 : i32
    %c0_i32_0 = arith.constant 0 : i32
    %c0_i32_1 = arith.constant 0 : i32
    return %c0_i32, %c0_i32_0 : i32, i32
  }
  func.func @transform_4(%arg0: i32, %arg1: i32) -> (i32, i32) {
    %c0_i32 = arith.constant 0 : i32
    %c0_i32_0 = arith.constant 0 : i32
    %c0_i32_1 = arith.constant 0 : i32
    return %c0_i32, %c0_i32_0 : i32, i32
  }
  func.func @transform_5(%arg0: i32, %arg1: i32) -> (i32, i32) {
    %c0_i32 = arith.constant 0 : i32
    %c0_i32_0 = arith.constant 0 : i32
    %c0_i32_1 = arith.constant 0 : i32
    return %c0_i32, %c0_i32_0 : i32, i32
  }
  func.func @transform_6(%arg0: i32, %arg1: i32) -> (i32, i32) {
    %c0_i32 = arith.constant 0 : i32
    %c0_i32_0 = arith.constant 0 : i32
    %c0_i32_1 = arith.constant 0 : i32
    return %c0_i32, %c0_i32_0 : i32, i32
  }
  func.func @transform_7(%arg0: i32, %arg1: i32) -> (i32, i32) {
    %c0_i32 = arith.constant 0 : i32
    %c0_i32_0 = arith.constant 0 : i32
    %c0_i32_1 = arith.constant 0 : i32
    return %c0_i32, %c0_i32_0 : i32, i32
  }
  func.func @transform_8(%arg0: i32, %arg1: i32) -> (i32, i32) {
    %c0_i32 = arith.constant 0 : i32
    %c0_i32_0 = arith.constant 0 : i32
    %c0_i32_1 = arith.constant 0 : i32
    return %c0_i32, %c0_i32_0 : i32, i32
  }
  func.func @transform_9(%arg0: i32, %arg1: i32) -> (i32, i32) {
    %c0_i32 = arith.constant 0 : i32
    %c0_i32_0 = arith.constant 0 : i32
    %c0_i32_1 = arith.constant 0 : i32
    return %c0_i32, %c0_i32_0 : i32, i32
  }
  func.func @transform_10(%arg0: i32, %arg1: i32) -> (i32, i32) {
    %c0_i32 = arith.constant 0 : i32
    %c0_i32_0 = arith.constant 0 : i32
    %c0_i32_1 = arith.constant 0 : i32
    return %c0_i32, %c0_i32_0 : i32, i32
  }
  func.func @transform_11(%arg0: i32, %arg1: i32) -> (i32, i32) {
    %c0_i32 = arith.constant 0 : i32
    %c0_i32_0 = arith.constant 0 : i32
    %c0_i32_1 = arith.constant 0 : i32
    return %c0_i32, %c0_i32_0 : i32, i32
  }
  func.func @transform_12(%arg0: i32, %arg1: i32) -> (i32, i32, i32) {
    %c0_i32 = arith.constant 0 : i32
    %c0_i32_0 = arith.constant 0 : i32
    return %arg0, %c0_i32, %arg1 : i32, i32, i32
  }
}

module attributes {stable_mosaic.version = 11 : i64} {
  func.func @_stats_kernel(%arg0: i32, %arg1: i32, %arg2: memref<1x4x128xf32, #tpu.memory_space<vmem>>, %arg3: memref<1x4x128xf32, #tpu.memory_space<vmem>>, %arg4: memref<8x4xf32, #tpu.memory_space<vmem>>, %arg5: memref<8x4xf32, #tpu.memory_space<vmem>>, %arg6: memref<8x1xf32, #tpu.memory_space<vmem>>, %arg7: memref<8x1xf32, #tpu.memory_space<vmem>>, %arg8: memref<8x1xf32, #tpu.memory_space<vmem>>, %arg9: memref<8x1xf32, #tpu.memory_space<vmem>>, %arg10: memref<8x1xf32, #tpu.memory_space<vmem>>, %arg11: memref<8x1xf32, #tpu.memory_space<vmem>>) attributes {dimension_semantics = [#tpu.dimension_semantics<arbitrary>, #tpu.dimension_semantics<arbitrary>], iteration_bounds = array<i64: 2, 2>, scalar_prefetch = 0 : i64, scratch_operands = 0 : i64, tpu.core_type = #tpu.core_type<tc>, window_params = [{transform_indices = @transform_0, window_bounds = array<i64: 1, 4, 128>}, {transform_indices = @transform_1, window_bounds = array<i64: 1, 4, 128>}, {pipeline_mode = #tpu.pipeline_mode<synchronous>, transform_indices = @transform_2, window_bounds = array<i64: 8, 4>}, {pipeline_mode = #tpu.pipeline_mode<synchronous>, transform_indices = @transform_3, window_bounds = array<i64: 8, 4>}, {pipeline_mode = #tpu.pipeline_mode<synchronous>, transform_indices = @transform_4, window_bounds = array<i64: 8, 1>}, {pipeline_mode = #tpu.pipeline_mode<synchronous>, transform_indices = @transform_5, window_bounds = array<i64: 8, 1>}, {pipeline_mode = #tpu.pipeline_mode<synchronous>, transform_indices = @transform_6, window_bounds = array<i64: 8, 1>}, {pipeline_mode = #tpu.pipeline_mode<synchronous>, transform_indices = @transform_7, window_bounds = array<i64: 8, 1>}, {pipeline_mode = #tpu.pipeline_mode<synchronous>, transform_indices = @transform_8, window_bounds = array<i64: 8, 1>}, {pipeline_mode = #tpu.pipeline_mode<synchronous>, transform_indices = @transform_9, window_bounds = array<i64: 8, 1>}]} {
    %c0_i32 = arith.constant 0 : i32
    %0 = arith.cmpi eq, %arg0, %c0_i32 : i32
    %c0_i32_0 = arith.constant 0 : i32
    %1 = arith.cmpi eq, %arg1, %c0_i32_0 : i32
    %2 = arith.andi %0, %1 : i1
    %3 = arith.extui %2 : i1 to i32
    %c0_i32_1 = arith.constant 0 : i32
    %4 = arith.cmpi ne, %3, %c0_i32_1 : i32
    scf.if %4 {
      %cst_36 = arith.constant 0.000000e+00 : f32
      %41 = vector.broadcast %cst_36 : f32 to vector<8x1xf32>
      %c0_37 = arith.constant 0 : index
      %c0_38 = arith.constant 0 : index
      %42 = vector.load %arg8[%c0_37, %c0_38] : memref<8x1xf32, #tpu.memory_space<vmem>>, vector<8x1xf32>
      tpu.vector_store %arg8[%c0_37, %c0_38], %41 {strides = array<i32>} : memref<8x1xf32, #tpu.memory_space<vmem>>, vector<8x1xf32>,
      %cst_39 = arith.constant 0.000000e+00 : f32
      %43 = vector.broadcast %cst_39 : f32 to vector<8x1xf32>
      %c0_40 = arith.constant 0 : index
      %c0_41 = arith.constant 0 : index
      %44 = vector.load %arg9[%c0_40, %c0_41] : memref<8x1xf32, #tpu.memory_space<vmem>>, vector<8x1xf32>
      tpu.vector_store %arg9[%c0_40, %c0_41], %43 {strides = array<i32>} : memref<8x1xf32, #tpu.memory_space<vmem>>, vector<8x1xf32>,
      %cst_42 = arith.constant 0.000000e+00 : f32
      %45 = vector.broadcast %cst_42 : f32 to vector<8x1xf32>
      %c0_43 = arith.constant 0 : index
      %c0_44 = arith.constant 0 : index
      %46 = vector.load %arg10[%c0_43, %c0_44] : memref<8x1xf32, #tpu.memory_space<vmem>>, vector<8x1xf32>
      tpu.vector_store %arg10[%c0_43, %c0_44], %45 {strides = array<i32>} : memref<8x1xf32, #tpu.memory_space<vmem>>, vector<8x1xf32>,
      %cst_45 = arith.constant 0.000000e+00 : f32
      %47 = vector.broadcast %cst_45 : f32 to vector<8x1xf32>
      %c0_46 = arith.constant 0 : index
      %c0_47 = arith.constant 0 : index
      %48 = vector.load %arg11[%c0_46, %c0_47] : memref<8x1xf32, #tpu.memory_space<vmem>>, vector<8x1xf32>
      tpu.vector_store %arg11[%c0_46, %c0_47], %47 {strides = array<i32>} : memref<8x1xf32, #tpu.memory_space<vmem>>, vector<8x1xf32>,
    } else {
    }
    %c0 = arith.constant 0 : index
    %c0_2 = arith.constant 0 : index
    %5 = vector.load %arg4[%c0, %c0_2] : memref<8x4xf32, #tpu.memory_space<vmem>>, vector<8x4xf32>
    %c0_3 = arith.constant 0 : index
    %c0_4 = arith.constant 0 : index
    %c0_5 = arith.constant 0 : index
    %6 = vector.load %arg2[%c0_3, %c0_4, %c0_5] : memref<1x4x128xf32, #tpu.memory_space<vmem>>, vector<1x4x128xf32>
    %7 = vector.shape_cast %6 : vector<1x4x128xf32> to vector<4x128xf32>
    %cst = arith.constant dense<0.000000e+00> : vector<8x128xf32>
    %8 = tpu.matmul %5, %7, %cst {dimension_numbers = #tpu.dot_dimension_numbers<[1], [0], [0], [1], [0, 0, 1, 1], [], []>} : vector<8x4xf32>, vector<4x128xf32>, vector<8x128xf32> -> vector<8x128xf32>
    %c0_6 = arith.constant 0 : index
    %c0_7 = arith.constant 0 : index
    %9 = vector.load %arg6[%c0_6, %c0_7] : memref<8x1xf32, #tpu.memory_space<vmem>>, vector<8x1xf32>
    %10 = vector.broadcast %9 : vector<8x1xf32> to vector<8x128xf32>
    %11 = arith.addf %8, %10 : vector<8x128xf32>
    %c0_8 = arith.constant 0 : index
    %c0_9 = arith.constant 0 : index
    %12 = vector.load %arg5[%c0_8, %c0_9] : memref<8x4xf32, #tpu.memory_space<vmem>>, vector<8x4xf32>
    %c0_10 = arith.constant 0 : index
    %c0_11 = arith.constant 0 : index
    %c0_12 = arith.constant 0 : index
    %13 = vector.load %arg3[%c0_10, %c0_11, %c0_12] : memref<1x4x128xf32, #tpu.memory_space<vmem>>, vector<1x4x128xf32>
    %14 = vector.shape_cast %13 : vector<1x4x128xf32> to vector<4x128xf32>
    %cst_13 = arith.constant dense<0.000000e+00> : vector<8x128xf32>
    %15 = tpu.matmul %12, %14, %cst_13 {dimension_numbers = #tpu.dot_dimension_numbers<[1], [0], [0], [1], [0, 0, 1, 1], [], []>} : vector<8x4xf32>, vector<4x128xf32>, vector<8x128xf32> -> vector<8x128xf32>
    %c0_14 = arith.constant 0 : index
    %c0_15 = arith.constant 0 : index
    %16 = vector.load %arg7[%c0_14, %c0_15] : memref<8x1xf32, #tpu.memory_space<vmem>>, vector<8x1xf32>
    %17 = vector.broadcast %16 : vector<8x1xf32> to vector<8x128xf32>
    %18 = arith.addf %15, %17 : vector<8x128xf32>
    %c0_16 = arith.constant 0 : index
    %c0_17 = arith.constant 0 : index
    %19 = vector.load %arg8[%c0_16, %c0_17] : memref<8x1xf32, #tpu.memory_space<vmem>>, vector<8x1xf32>
    %cst_18 = arith.constant dense<0.000000e+00> : vector<8xf32>
    %20 = vector.multi_reduction <add>, %11, %cst_18 [1] : vector<8x128xf32> to vector<8xf32>
    %21 = vector.shape_cast %20 : vector<8xf32> to vector<8x1xf32>
    %22 = arith.addf %19, %21 : vector<8x1xf32>
    %c0_19 = arith.constant 0 : index
    %c0_20 = arith.constant 0 : index
    %23 = vector.load %arg8[%c0_19, %c0_20] : memref<8x1xf32, #tpu.memory_space<vmem>>, vector<8x1xf32>
    tpu.vector_store %arg8[%c0_19, %c0_20], %22 {strides = array<i32>} : memref<8x1xf32, #tpu.memory_space<vmem>>, vector<8x1xf32>,
    %c0_21 = arith.constant 0 : index
    %c0_22 = arith.constant 0 : index
    %24 = vector.load %arg9[%c0_21, %c0_22] : memref<8x1xf32, #tpu.memory_space<vmem>>, vector<8x1xf32>
    %25 = arith.mulf %11, %11 : vector<8x128xf32>
    %cst_23 = arith.constant dense<0.000000e+00> : vector<8xf32>
    %26 = vector.multi_reduction <add>, %25, %cst_23 [1] : vector<8x128xf32> to vector<8xf32>
    %27 = vector.shape_cast %26 : vector<8xf32> to vector<8x1xf32>
    %28 = arith.addf %24, %27 : vector<8x1xf32>
    %c0_24 = arith.constant 0 : index
    %c0_25 = arith.constant 0 : index
    %29 = vector.load %arg9[%c0_24, %c0_25] : memref<8x1xf32, #tpu.memory_space<vmem>>, vector<8x1xf32>
    tpu.vector_store %arg9[%c0_24, %c0_25], %28 {strides = array<i32>} : memref<8x1xf32, #tpu.memory_space<vmem>>, vector<8x1xf32>,
    %c0_26 = arith.constant 0 : index
    %c0_27 = arith.constant 0 : index
    %30 = vector.load %arg10[%c0_26, %c0_27] : memref<8x1xf32, #tpu.memory_space<vmem>>, vector<8x1xf32>
    %cst_28 = arith.constant dense<0.000000e+00> : vector<8xf32>
    %31 = vector.multi_reduction <add>, %18, %cst_28 [1] : vector<8x128xf32> to vector<8xf32>
    %32 = vector.shape_cast %31 : vector<8xf32> to vector<8x1xf32>
    %33 = arith.addf %30, %32 : vector<8x1xf32>
    %c0_29 = arith.constant 0 : index
    %c0_30 = arith.constant 0 : index
    %34 = vector.load %arg10[%c0_29, %c0_30] : memref<8x1xf32, #tpu.memory_space<vmem>>, vector<8x1xf32>
    tpu.vector_store %arg10[%c0_29, %c0_30], %33 {strides = array<i32>} : memref<8x1xf32, #tpu.memory_space<vmem>>, vector<8x1xf32>,
    %c0_31 = arith.constant 0 : index
    %c0_32 = arith.constant 0 : index
    %35 = vector.load %arg11[%c0_31, %c0_32] : memref<8x1xf32, #tpu.memory_space<vmem>>, vector<8x1xf32>
    %36 = arith.mulf %18, %18 : vector<8x128xf32>
    %cst_33 = arith.constant dense<0.000000e+00> : vector<8xf32>
    %37 = vector.multi_reduction <add>, %36, %cst_33 [1] : vector<8x128xf32> to vector<8xf32>
    %38 = vector.shape_cast %37 : vector<8xf32> to vector<8x1xf32>
    %39 = arith.addf %35, %38 : vector<8x1xf32>
    %c0_34 = arith.constant 0 : index
    %c0_35 = arith.constant 0 : index
    %40 = vector.load %arg11[%c0_34, %c0_35] : memref<8x1xf32, #tpu.memory_space<vmem>>, vector<8x1xf32>
    tpu.vector_store %arg11[%c0_34, %c0_35], %39 {strides = array<i32>} : memref<8x1xf32, #tpu.memory_space<vmem>>, vector<8x1xf32>,
    return
  }
  func.func @transform_0(%arg0: i32, %arg1: i32) -> (i32, i32, i32) {
    %c0_i32 = arith.constant 0 : i32
    %c0_i32_0 = arith.constant 0 : i32
    return %arg0, %c0_i32, %arg1 : i32, i32, i32
  }
  func.func @transform_1(%arg0: i32, %arg1: i32) -> (i32, i32, i32) {
    %c0_i32 = arith.constant 0 : i32
    %c0_i32_0 = arith.constant 0 : i32
    return %arg0, %c0_i32, %arg1 : i32, i32, i32
  }
  func.func @transform_2(%arg0: i32, %arg1: i32) -> (i32, i32) {
    %c0_i32 = arith.constant 0 : i32
    %c0_i32_0 = arith.constant 0 : i32
    %c0_i32_1 = arith.constant 0 : i32
    return %c0_i32, %c0_i32_0 : i32, i32
  }
  func.func @transform_3(%arg0: i32, %arg1: i32) -> (i32, i32) {
    %c0_i32 = arith.constant 0 : i32
    %c0_i32_0 = arith.constant 0 : i32
    %c0_i32_1 = arith.constant 0 : i32
    return %c0_i32, %c0_i32_0 : i32, i32
  }
  func.func @transform_4(%arg0: i32, %arg1: i32) -> (i32, i32) {
    %c0_i32 = arith.constant 0 : i32
    %c0_i32_0 = arith.constant 0 : i32
    %c0_i32_1 = arith.constant 0 : i32
    return %c0_i32, %c0_i32_0 : i32, i32
  }
  func.func @transform_5(%arg0: i32, %arg1: i32) -> (i32, i32) {
    %c0_i32 = arith.constant 0 : i32
    %c0_i32_0 = arith.constant 0 : i32
    %c0_i32_1 = arith.constant 0 : i32
    return %c0_i32, %c0_i32_0 : i32, i32
  }
  func.func @transform_6(%arg0: i32, %arg1: i32) -> (i32, i32) {
    %c0_i32 = arith.constant 0 : i32
    %c0_i32_0 = arith.constant 0 : i32
    %c0_i32_1 = arith.constant 0 : i32
    return %c0_i32, %c0_i32_0 : i32, i32
  }
  func.func @transform_7(%arg0: i32, %arg1: i32) -> (i32, i32) {
    %c0_i32 = arith.constant 0 : i32
    %c0_i32_0 = arith.constant 0 : i32
    %c0_i32_1 = arith.constant 0 : i32
    return %c0_i32, %c0_i32_0 : i32, i32
  }
  func.func @transform_8(%arg0: i32, %arg1: i32) -> (i32, i32) {
    %c0_i32 = arith.constant 0 : i32
    %c0_i32_0 = arith.constant 0 : i32
    %c0_i32_1 = arith.constant 0 : i32
    return %c0_i32, %c0_i32_0 : i32, i32
  }
  func.func @transform_9(%arg0: i32, %arg1: i32) -> (i32, i32) {
    %c0_i32 = arith.constant 0 : i32
    %c0_i32_0 = arith.constant 0 : i32
    %c0_i32_1 = arith.constant 0 : i32
    return %c0_i32, %c0_i32_0 : i32, i32
  }
}

module attributes {stable_mosaic.version = 11 : i64} {
  func.func @_apply_kernel(%arg0: i32, %arg1: i32, %arg2: memref<1x4x128xf32, #tpu.memory_space<vmem>>, %arg3: memref<1x1x128xf32, #tpu.memory_space<vmem>>, %arg4: memref<1x2xf32, #tpu.memory_space<vmem>>, %arg5: memref<1x4x128xf32, #tpu.memory_space<vmem>>) attributes {dimension_semantics = [#tpu.dimension_semantics<parallel>, #tpu.dimension_semantics<parallel>], iteration_bounds = array<i64: 2, 2>, scalar_prefetch = 0 : i64, scratch_operands = 0 : i64, tpu.core_type = #tpu.core_type<tc>, window_params = [{transform_indices = @transform_0, window_bounds = array<i64: 1, 4, 128>}, {transform_indices = @transform_1, window_bounds = array<i64: 1, 1, 128>}, {pipeline_mode = #tpu.pipeline_mode<synchronous>, transform_indices = @transform_2, window_bounds = array<i64: 1, 2>}, {transform_indices = @transform_3, window_bounds = array<i64: 1, 4, 128>}]} {
    %c0 = arith.constant 0 : index
    %c0_0 = arith.constant 0 : index
    %0 = vector.load %arg4[%c0, %c0_0] : memref<1x2xf32, #tpu.memory_space<vmem>>, vector<1x2xf32>
    %1 = vector.extract_strided_slice %0 {offsets = [0, 0], sizes = [1, 1], strides = [1, 1]} : vector<1x2xf32> to vector<1x1xf32>
    %2 = vector.extract_strided_slice %0 {offsets = [0, 1], sizes = [1, 1], strides = [1, 1]} : vector<1x2xf32> to vector<1x1xf32>
    %c0_1 = arith.constant 0 : index
    %c0_2 = arith.constant 0 : index
    %c0_3 = arith.constant 0 : index
    %3 = vector.load %arg3[%c0_1, %c0_2, %c0_3] : memref<1x1x128xf32, #tpu.memory_space<vmem>>, vector<1x1x128xf32>
    %4 = vector.shape_cast %3 : vector<1x1x128xf32> to vector<1x128xf32>
    %5 = vector.broadcast %1 : vector<1x1xf32> to vector<1x128xf32>
    %6 = arith.mulf %4, %5 : vector<1x128xf32>
    %7 = vector.broadcast %2 : vector<1x1xf32> to vector<1x128xf32>
    %8 = arith.addf %6, %7 : vector<1x128xf32>
    %9 = arith.negf %8 : vector<1x128xf32>
    %10 = math.exp %9 : vector<1x128xf32>
    %cst = arith.constant 1.000000e+00 : f32
    %11 = vector.broadcast %cst : f32 to vector<1x128xf32>
    %12 = arith.addf %11, %10 : vector<1x128xf32>
    %13 = arith.divf %11, %12 : vector<1x128xf32>
    %c0_4 = arith.constant 0 : index
    %c0_5 = arith.constant 0 : index
    %c0_6 = arith.constant 0 : index
    %14 = vector.load %arg2[%c0_4, %c0_5, %c0_6] : memref<1x4x128xf32, #tpu.memory_space<vmem>>, vector<1x4x128xf32>
    %15 = vector.shape_cast %14 : vector<1x4x128xf32> to vector<4x128xf32>
    %16 = vector.broadcast %13 : vector<1x128xf32> to vector<4x128xf32>
    %17 = arith.mulf %15, %16 : vector<4x128xf32>
    %c0_7 = arith.constant 0 : index
    %c0_8 = arith.constant 0 : index
    %c0_9 = arith.constant 0 : index
    %18 = vector.load %arg5[%c0_7, %c0_8, %c0_9] : memref<1x4x128xf32, #tpu.memory_space<vmem>>, vector<1x4x128xf32>
    %19 = vector.shape_cast %18 : vector<1x4x128xf32> to vector<4x128xf32>
    %20 = vector.shape_cast %17 : vector<4x128xf32> to vector<1x4x128xf32>
    tpu.vector_store %arg5[%c0_7, %c0_8, %c0_9], %20 {strides = array<i32>} : memref<1x4x128xf32, #tpu.memory_space<vmem>>, vector<1x4x128xf32>,
    return
  }
  func.func @transform_0(%arg0: i32, %arg1: i32) -> (i32, i32, i32) {
    %c0_i32 = arith.constant 0 : i32
    %c0_i32_0 = arith.constant 0 : i32
    return %arg0, %c0_i32, %arg1 : i32, i32, i32
  }
  func.func @transform_1(%arg0: i32, %arg1: i32) -> (i32, i32, i32) {
    %c0_i32 = arith.constant 0 : i32
    %c0_i32_0 = arith.constant 0 : i32
    return %arg0, %c0_i32, %arg1 : i32, i32, i32
  }
  func.func @transform_2(%arg0: i32, %arg1: i32) -> (i32, i32) {
    %c0_i32 = arith.constant 0 : i32
    %c0_i32_0 = arith.constant 0 : i32
    %c0_i32_1 = arith.constant 0 : i32
    return %c0_i32, %c0_i32_0 : i32, i32
  }
  func.func @transform_3(%arg0: i32, %arg1: i32) -> (i32, i32, i32) {
    %c0_i32 = arith.constant 0 : i32
    %c0_i32_0 = arith.constant 0 : i32
    return %arg0, %c0_i32, %arg1 : i32, i32, i32
  }
}

</mosaic_0001>

<llo_original>
// kernel: attention_block.5
$region0: #{attention_block.5}
  #allocation0 [shape = 'u32[]', space=smem, size = 0x4, offset = 0x4, fixed_abs, tag = 'smem constant byte address 0x4 - core index']
  #allocation1 [shape = 'u32[72,128]{1,0:T(1,128)}', space=vmem, size = 0x9000, scoped, tag = 'internal scratch']
  %s0 = inlined_call_operand.vmem [shape: f32[2,4,256], index: 0, kind: input, shape index: {}]
  %s1 = inlined_call_operand.vmem [shape: f32[2,1,256], index: 1, kind: input, shape index: {}]
  %s2 = inlined_call_operand.vmem [shape: f32[1,2], index: 2, kind: input, shape index: {}]
  %s3 = inlined_call_operand.vmem [shape: f32[2,4,256], index: 3, kind: output, shape index: {}]
  %s4 = sld [smem:[#allocation0]]
  $region45: #{attention_block.5} parent=0
    _
  %s6 = ssub.s32 1, %s4
  %s7 = scalar_select 0, %s6, %s4
  loop: start=0, step=1, limit=6
  $region2: #{attention_block.5} parent=0 // loop_pre_header
    _
  $region3: #{attention_block.5} parent=0 // loop_header
    %s9 = sphi 0, %s13
    %p10 = scmp.ge.s32.totalorder %s9, 6
    %s16 = sphi 0, %s28
    %s17 = sphi 0, %s24
    %s18 = sphi 0, %s16
    %s19 = sphi 0, %s17
    %s20 = sphi 0, %s18
    %s21 = sphi 0, %s19
    %s33 = sphi 0, %s35
    %s36 = sphi 0, %s33
    %s37 = sphi 0, %s36
    %s53 = sphi 0, %s37
    %s61 = sphi 0, %s63
    %s64 = sphi 0, %s61
    %s65 = sphi 0, %s64
    %s81 = sphi 0, %s65
    %s85 = sphi 0, %s85
    %s87 = sphi 0, %s85
    %s88 = sphi 0, %s87
    %s102 = sphi 0, %s88
    %s110 = sphi 0, %s112
    %s113 = sphi 0, %s110
    %s114 = sphi 0, %s113
    %s130 = sphi 0, %s114
  $region4: #{attention_block.5} parent=0 // loop_header_branch
    %12 = sbr.rel (%p10) target = $region8
  $region5: #{attention_block.5} parent=0 // loop_body
    %s14 = ssub.s32 %s9, 1
    %s15 = ssub.s32 %s9, 2
    %s22 = sadd.s32 1, %s17
    %p23 = scmp.ge.s32.totalorder %s22, 2
    %s24 = scalar_select %p23, 0, %s22
    %s25 = sadd.s32 1, %s16
    %s26 = scalar_select %p23, %s25, %s16
    %p27 = scmp.ge.s32.totalorder %s26, 2
    %s28 = scalar_select %p27, 0, %s26
    %s29 = ssub.s32 %s16, %s28
    %s30 = ssub.s32 %s17, %s24
    %s31 = sor.u32 %s29, %s30
    %p32 = scmp.eq.s32.totalorder %s31, 0
    %s34 = sadd.s32 %s33, 1
    %s35 = scalar_select %p32, %s33, %s34
    %p38 = pneg %p32
    %p39 = scmp.eq.s32.totalorder %s9, 3
    %p40 = por %p38, %p39
    %p41 = scmp.ne.s32.totalorder %s33, %s36
    %p42 = scmp.eq.s32.totalorder %s9, 0
    %p43 = por %p41, %p42
    %p44 = scmp.ne.s32.totalorder %s33, %s36
    %p45 = scmp.eq.s32.totalorder %s14, 3
    %p46 = por %p44, %p45
    %p47 = scmp.ne.s32.totalorder %s36, %s37
    %p48 = scmp.eq.s32.totalorder %s14, 0
    %p49 = por %p47, %p48
    %p50 = scmp.ne.s32.totalorder %s36, %s37
    %p51 = scmp.eq.s32.totalorder %s15, 3
    %p52 = por %p50, %p51
    %p54 = scmp.ne.s32.totalorder %s37, %s53
    %p55 = scmp.eq.s32.totalorder %s15, 0
    %p56 = por %p54, %p55
    %s57 = ssub.s32 %s16, %s28
    %s58 = ssub.s32 %s17, %s24
    %s59 = sor.u32 %s57, %s58
    %p60 = scmp.eq.s32.totalorder %s59, 0
    %s62 = sadd.s32 %s61, 1
    %s63 = scalar_select %p60, %s61, %s62
    %p66 = pneg %p60
    %p67 = scmp.eq.s32.totalorder %s9, 3
    %p68 = por %p66, %p67
    %p69 = scmp.ne.s32.totalorder %s61, %s64
    %p70 = scmp.eq.s32.totalorder %s9, 0
    %p71 = por %p69, %p70
    %p72 = scmp.ne.s32.totalorder %s61, %s64
    %p73 = scmp.eq.s32.totalorder %s14, 3
    %p74 = por %p72, %p73
    %p75 = scmp.ne.s32.totalorder %s64, %s65
    %p76 = scmp.eq.s32.totalorder %s14, 0
    %p77 = por %p75, %p76
    %p78 = scmp.ne.s32.totalorder %s64, %s65
    %p79 = scmp.eq.s32.totalorder %s15, 3
    %p80 = por %p78, %p79
    %p82 = scmp.ne.s32.totalorder %s65, %s81
    %p83 = scmp.eq.s32.totalorder %s15, 0
    %p84 = por %p82, %p83
    %s86 = sadd.s32 %s85, 1
    %p89 = scmp.eq.s32.totalorder %s9, 3
    %p90 = scmp.ne.s32.totalorder %s85, %s87
    %p91 = scmp.eq.s32.totalorder %s9, 0
    %p92 = por %p90, %p91
    %p93 = scmp.ne.s32.totalorder %s85, %s87
    %p94 = scmp.eq.s32.totalorder %s14, 3
    %p95 = por %p93, %p94
    %p96 = scmp.ne.s32.totalorder %s87, %s88
    %p97 = scmp.eq.s32.totalorder %s14, 0
    %p98 = por %p96, %p97
    %p99 = scmp.ne.s32.totalorder %s87, %s88
    %p100 = scmp.eq.s32.totalorder %s15, 3
    %p101 = por %p99, %p100
    %p103 = scmp.ne.s32.totalorder %s88, %s102
    %p104 = scmp.eq.s32.totalorder %s15, 0
    %p105 = por %p103, %p104
    %s106 = ssub.s32 %s16, %s28
    %s107 = ssub.s32 %s17, %s24
    %s108 = sor.u32 %s106, %s107
    %p109 = scmp.eq.s32.totalorder %s108, 0
    %s111 = sadd.s32 %s110, 1
    %s112 = scalar_select %p109, %s110, %s111
    %p115 = pneg %p109
    %p116 = scmp.eq.s32.totalorder %s9, 3
    %p117 = por %p115, %p116
    %p118 = scmp.ne.s32.totalorder %s110, %s113
    %p119 = scmp.eq.s32.totalorder %s9, 0
    %p120 = por %p118, %p119
    %p121 = scmp.ne.s32.totalorder %s110, %s113
    %p122 = scmp.eq.s32.totalorder %s14, 3
    %p123 = por %p121, %p122
    %p124 = scmp.ne.s32.totalorder %s113, %s114
    %p125 = scmp.eq.s32.totalorder %s14, 0
    %p126 = por %p124, %p125
    %p127 = scmp.ne.s32.totalorder %s113, %s114
    %p128 = scmp.eq.s32.totalorder %s15, 3
    %p129 = por %p127, %p128
    %p131 = scmp.ne.s32.totalorder %s114, %s130
    %p132 = scmp.eq.s32.totalorder %s15, 0
    %p133 = por %p131, %p132
    %p134 = scmp.le.s32.totalorder 1, %s9
    %p135 = scmp.lt.s32.totalorder %s9, 5
    %p136 = pnand %p134, %p135
    %p137 = pneg %p136
    // Predicated region
    $region9: #{attention_block.5} parent=5 // pred_check
      _
    $region10: #{attention_block.5} parent=5 // pred_check_branch
      %139 = sbr.rel (%p136) target = $region12
    $region11: #{attention_block.5} parent=5 // pred_region
      %s140 = ssub.s32 %s9, 1
      // Predicated region
      $region13: #{attention_block.5} parent=11 // pred_check
        %p141 = pneg %p98
      $region14: #{attention_block.5} parent=11 // pred_check_branch
        %143 = sbr.rel (%p141) target = $region16
      $region15: #{attention_block.5} parent=11 // pred_region
        _
      $region16: #{attention_block.5} parent=11 // pred_fallthru
        _
    $region12: #{attention_block.5} parent=5 // pred_fallthru
      _
    %p144 = scmp.lt.s32.totalorder %s9, 4
    // Predicated region
    $region17: #{attention_block.5} parent=5 // pred_check
      %p145 = pneg %p144
    $region18: #{attention_block.5} parent=5 // pred_check_branch
      %147 = sbr.rel (%p145) target = $region20
    $region19: #{attention_block.5} parent=5 // pred_region
      // Predicated region
      $region21: #{attention_block.5} parent=19 // pred_check
        %p148 = pneg %p43
      $region22: #{attention_block.5} parent=19 // pred_check_branch
        %150 = sbr.rel (%p148) target = $region24
      $region23: #{attention_block.5} parent=19 // pred_region
        %p151 = scmp.lt.s32.totalorder %s16, 1
        %s152 = scalar_select %p151, %s16, 1
        %p153 = scmp.lt.s32.totalorder %s17, 1
        %s154 = scalar_select %p153, %s17, 1
        %s155 = smul.addr %s152, 2
        %s156 = sadd.s32 %s154, %s155
        %s157 = smul.addr %s156, 4
        %s158 = scalar_lea.vmem %s0, %s157
      $region24: #{attention_block.5} parent=19 // pred_fallthru
        _
      // Predicated region
      $region25: #{attention_block.5} parent=19 // pred_check
        %p159 = pneg %p71
      $region26: #{attention_block.5} parent=19 // pred_check_branch
        %161 = sbr.rel (%p159) target = $region28
      $region27: #{attention_block.5} parent=19 // pred_region
        %p162 = scmp.lt.s32.totalorder %s16, 1
        %s163 = scalar_select %p162, %s16, 1
        %p164 = scmp.lt.s32.totalorder %s17, 1
        %s165 = scalar_select %p164, %s17, 1
        %s166 = smul.addr %s163, 2
        %s167 = sadd.s32 %s165, %s166
        %s168 = scalar_lea.vmem %s1, %s167
      $region28: #{attention_block.5} parent=19 // pred_fallthru
        _
    $region20: #{attention_block.5} parent=5 // pred_fallthru
      _
    %p169 = scmp.le.s32.totalorder 1, %s9
    %p170 = scmp.lt.s32.totalorder %s9, 5
    %p171 = pnand %p169, %p170
    %p172 = pneg %p171
    // Predicated region
    $region29: #{attention_block.5} parent=5 // pred_check
      _
    $region30: #{attention_block.5} parent=5 // pred_check_branch
      %174 = sbr.rel (%p171) target = $region32
    $region31: #{attention_block.5} parent=5 // pred_region
      %s175 = ssub.s32 %s9, 1
      %p176 = scmp.lt.s32.totalorder %s18, 1
      %s177 = scalar_select %p176, %s18, 1
      %p178 = scmp.lt.s32.totalorder %s19, 1
      %s179 = scalar_select %p178, %s19, 1
      %s180 = smul.addr %s177, 2
      %s181 = sadd.s32 %s179, %s180
      %s182 = smul.addr %s181, 4
      %s183 = scalar_lea.vmem %s0, %s182
      %p184 = pneg %p49
      %p185 = pneg %p46
      %p186 = scmp.lt.s32.totalorder %s18, 1
      %s187 = scalar_select %p186, %s18, 1
      %p188 = scmp.lt.s32.totalorder %s19, 1
      %s189 = scalar_select %p188, %s19, 1
      %s190 = smul.addr %s187, 2
      %s191 = sadd.s32 %s189, %s190
      %s192 = scalar_lea.vmem %s1, %s191
      %p193 = pneg %p77
      %p194 = pneg %p74
      %p195 = pneg %p98
      %p196 = pneg %p95
      %p197 = pneg %p126
      %p198 = pneg %p123
      %p199 = scmp.lt.s32.totalorder %s18, 1
      %s200 = scalar_select %p199, %s18, 1
      %p201 = scmp.lt.s32.totalorder %s19, 1
      %s202 = scalar_select %p201, %s19, 1
      %s203 = smul.addr %s200, 2
      %s204 = sadd.s32 %s202, %s203
      %s205 = smul.addr %s204, 4
      %s206 = scalar_lea.vmem %s3, %s205
      %p207 = scmp.lt.s32.totalorder %s18, 1
      %s208 = scalar_select %p207, %s18, 1
      %p209 = scmp.lt.s32.totalorder %s19, 1
      %s210 = scalar_select %p209, %s19, 1
      %s211 = smul.addr %s208, 2
      %s212 = sadd.s32 %s210, %s211
      %s213 = smul.addr %s212, 4
      %s214 = scalar_lea.vmem %s0, %s213
      %p215 = scmp.lt.s32.totalorder %s18, 1
      %s216 = scalar_select %p215, %s18, 1
      %p217 = scmp.lt.s32.totalorder %s19, 1
      %s218 = scalar_select %p217, %s19, 1
      %s219 = smul.addr %s216, 2
      %s220 = sadd.s32 %s218, %s219
      %s221 = scalar_lea.vmem %s1, %s220
      %p222 = scmp.lt.s32.totalorder %s18, 1
      %s223 = scalar_select %p222, %s18, 1
      %p224 = scmp.lt.s32.totalorder %s19, 1
      %s225 = scalar_select %p224, %s19, 1
      %s226 = smul.addr %s223, 2
      %s227 = sadd.s32 %s225, %s226
      %s228 = smul.addr %s227, 4
      %s229 = scalar_lea.vmem %s3, %s228
      %v230 = vld [vmem:[%s2] sm:$0x1]
      %v231 = vld [vmem:[%s221] sm:$0x1]
      %233 = vset.pattern.permute.xlu0 0
      %234 = vperm.xlu0 %233, %v230
      %v235 = vpop.permute.xlu0 %234
      %v237 = vperm.slane %v235, 0
      %v238 = vmul.f32 %v231, %v237
      %239 = vset.pattern.permute.xlu0 1
      %240 = vperm.xlu0 %239, %v230
      %v241 = vpop.permute.xlu0 %240
      %v243 = vperm.slane %v241, 0
      %v244 = vadd.f32 %v238, %v243
      %v245 = vxor.u32 %v244, 2147483648
      %v246 = vmul.f32 %v245, 1.442695
      %v247 = vpow.pop %v246
      %v248 = vadd.f32 %v247, 1.0
      %v249 = vrcp.pop %v248
      %v250 = vmul.f32 %v248, %v249
      %v251 = vsub.f32 1.0, %v250
      %v252 = vmul.f32 %v249, %v251
      %v253 = vadd.f32 %v249, %v252
      %vm254 = vweird.f32 %v248
      %vm255 = vweird.f32 %v249
      %vm256 = vmor %vm254, %vm255
      %v257 = vsel %vm256, %v249, %v253
      %v258 = vand.u32 2147483647, %v248
      %vm259 = vcmp.eq.f32.partialorder %v258, 8.507059e+37
      %v260 = vand.u32 %v248, 2147483648
      %v261 = vor.u32 1.1754944e-38, %v260
      %v262 = vsel %vm259, %v261, %v257
      %v263 = vmul.f32 1.0, %v262
      %v264 = vld [vmem:[%s214] sm:$0xf]
      %v266 = vperm.slane %v263, 0
      %v268 = vmul.f32 %v264, %v266
      %269 = vst [vmem:[%s229] sm:$0xf] %v268
      %p270 = scmp.lt.s32.totalorder %s18, 1
      %s271 = scalar_select %p270, %s18, 1
      %p272 = scmp.lt.s32.totalorder %s19, 1
      %s273 = scalar_select %p272, %s19, 1
      %s274 = smul.addr %s271, 2
      %s275 = sadd.s32 %s273, %s274
      %s276 = smul.addr %s275, 4
      %s277 = scalar_lea.vmem %s3, %s276
      // Predicated region
      $region33: #{attention_block.5} parent=31 // pred_check
        %p278 = pneg %p123
      $region34: #{attention_block.5} parent=31 // pred_check_branch
        %280 = sbr.rel (%p278) target = $region36
      $region35: #{attention_block.5} parent=31 // pred_region
        _
      $region36: #{attention_block.5} parent=31 // pred_fallthru
        _
    $region32: #{attention_block.5} parent=5 // pred_fallthru
      _
    %p281 = scmp.le.s32.totalorder 2, %s9
    // Predicated region
    $region37: #{attention_block.5} parent=5 // pred_check
      %p282 = pneg %p281
    $region38: #{attention_block.5} parent=5 // pred_check_branch
      %284 = sbr.rel (%p282) target = $region40
    $region39: #{attention_block.5} parent=5 // pred_region
      %s285 = ssub.s32 %s9, 2
      // Predicated region
      $region41: #{attention_block.5} parent=39 // pred_check
        %p286 = pneg %p129
      $region42: #{attention_block.5} parent=39 // pred_check_branch
        %288 = sbr.rel (%p286) target = $region44
      $region43: #{attention_block.5} parent=39 // pred_region
        %p289 = scmp.lt.s32.totalorder %s20, 1
        %s290 = scalar_select %p289, %s20, 1
        %p291 = scmp.lt.s32.totalorder %s21, 1
        %s292 = scalar_select %p291, %s21, 1
        %s293 = smul.addr %s290, 2
        %s294 = sadd.s32 %s292, %s293
        %s295 = smul.addr %s294, 4
        %s296 = scalar_lea.vmem %s3, %s295
      $region44: #{attention_block.5} parent=39 // pred_fallthru
        _
    $region40: #{attention_block.5} parent=5 // pred_fallthru
      _
  $region6: #{attention_block.5} parent=0 // loop_footer
    %s13 = sadd.s32 1, %s9
  $region7: #{attention_block.5} parent=0 // loop_footer_branch
    %8 = sbr.rel target = $region3
  $region8: #{attention_block.5} parent=0 // loop_exit
    _

// kernel: attention_block.3
$region0: #{attention_block.3}
  #allocation0 [shape = 'u32[]', space=smem, size = 0x4, offset = 0x4, fixed_abs, tag = 'smem constant byte address 0x4 - core index']
  #allocation1 [shape = 'u32[72,128]{1,0:T(1,128)}', space=vmem, size = 0x9000, scoped, tag = 'internal scratch']
  %s0 = inlined_call_operand.vmem [shape: f32[2,4,256], index: 0, kind: input, shape index: {}]
  %s1 = inlined_call_operand.vmem [shape: f32[2,4,256], index: 1, kind: input, shape index: {}]
  %s2 = inlined_call_operand.vmem [shape: f32[8,4], index: 2, kind: input, shape index: {}]
  %s3 = inlined_call_operand.vmem [shape: f32[8,4], index: 3, kind: input, shape index: {}]
  %s4 = inlined_call_operand.vmem [shape: f32[8,1], index: 4, kind: input, shape index: {}]
  %s5 = inlined_call_operand.vmem [shape: f32[8,1], index: 5, kind: input, shape index: {}]
  %s6 = inlined_call_operand.vmem [shape: f32[8,1], index: 6, kind: output, shape index: {0}]
  %s7 = inlined_call_operand.vmem [shape: f32[8,1], index: 7, kind: output, shape index: {1}]
  %s8 = inlined_call_operand.vmem [shape: f32[8,1], index: 8, kind: output, shape index: {2}]
  %s9 = inlined_call_operand.vmem [shape: f32[8,1], index: 9, kind: output, shape index: {3}]
  %10 = xla_tuple %s6, %s7, %s8, %s9
  %s11 = sld [smem:[#allocation0]]
  $region85: #{attention_block.3} parent=0
    _
  %s13 = ssub.s32 1, %s11
  %s14 = scalar_select 0, %s13, %s11
  loop: start=0, step=1, limit=6
  $region2: #{attention_block.3} parent=0 // loop_pre_header
    _
  $region3: #{attention_block.3} parent=0 // loop_header
    %s16 = sphi 0, %s20
    %p17 = scmp.ge.s32.totalorder %s16, 6
    %s23 = sphi 0, %s35
    %s24 = sphi 0, %s31
    %s25 = sphi 0, %s23
    %s26 = sphi 0, %s24
    %s27 = sphi 0, %s25
    %s28 = sphi 0, %s26
    %s40 = sphi 0, %s42
    %s43 = sphi 0, %s40
    %s44 = sphi 0, %s43
    %s60 = sphi 0, %s44
    %s68 = sphi 0, %s70
    %s71 = sphi 0, %s68
    %s72 = sphi 0, %s71
    %s88 = sphi 0, %s72
    %s92 = sphi 0, %s92
    %s94 = sphi 0, %s92
    %s95 = sphi 0, %s94
    %s109 = sphi 0, %s95
    %s113 = sphi 0, %s113
    %s115 = sphi 0, %s113
    %s116 = sphi 0, %s115
    %s130 = sphi 0, %s116
    %s134 = sphi 0, %s134
    %s136 = sphi 0, %s134
    %s137 = sphi 0, %s136
    %s151 = sphi 0, %s137
    %s155 = sphi 0, %s155
    %s157 = sphi 0, %s155
    %s158 = sphi 0, %s157
    %s172 = sphi 0, %s158
    %s176 = sphi 0, %s176
    %s178 = sphi 0, %s176
    %s179 = sphi 0, %s178
    %s193 = sphi 0, %s179
    %s197 = sphi 0, %s197
    %s199 = sphi 0, %s197
    %s200 = sphi 0, %s199
    %s214 = sphi 0, %s200
    %s218 = sphi 0, %s218
    %s220 = sphi 0, %s218
    %s221 = sphi 0, %s220
    %s235 = sphi 0, %s221
    %s239 = sphi 0, %s239
    %s241 = sphi 0, %s239
    %s242 = sphi 0, %s241
    %s256 = sphi 0, %s242
  $region4: #{attention_block.3} parent=0 // loop_header_branch
    %19 = sbr.rel (%p17) target = $region8
  $region5: #{attention_block.3} parent=0 // loop_body
    %s21 = ssub.s32 %s16, 1
    %s22 = ssub.s32 %s16, 2
    %s29 = sadd.s32 1, %s24
    %p30 = scmp.ge.s32.totalorder %s29, 2
    %s31 = scalar_select %p30, 0, %s29
    %s32 = sadd.s32 1, %s23
    %s33 = scalar_select %p30, %s32, %s23
    %p34 = scmp.ge.s32.totalorder %s33, 2
    %s35 = scalar_select %p34, 0, %s33
    %s36 = ssub.s32 %s23, %s35
    %s37 = ssub.s32 %s24, %s31
    %s38 = sor.u32 %s36, %s37
    %p39 = scmp.eq.s32.totalorder %s38, 0
    %s41 = sadd.s32 %s40, 1
    %s42 = scalar_select %p39, %s40, %s41
    %p45 = pneg %p39
    %p46 = scmp.eq.s32.totalorder %s16, 3
    %p47 = por %p45, %p46
    %p48 = scmp.ne.s32.totalorder %s40, %s43
    %p49 = scmp.eq.s32.totalorder %s16, 0
    %p50 = por %p48, %p49
    %p51 = scmp.ne.s32.totalorder %s40, %s43
    %p52 = scmp.eq.s32.totalorder %s21, 3
    %p53 = por %p51, %p52
    %p54 = scmp.ne.s32.totalorder %s43, %s44
    %p55 = scmp.eq.s32.totalorder %s21, 0
    %p56 = por %p54, %p55
    %p57 = scmp.ne.s32.totalorder %s43, %s44
    %p58 = scmp.eq.s32.totalorder %s22, 3
    %p59 = por %p57, %p58
    %p61 = scmp.ne.s32.totalorder %s44, %s60
    %p62 = scmp.eq.s32.totalorder %s22, 0
    %p63 = por %p61, %p62
    %s64 = ssub.s32 %s23, %s35
    %s65 = ssub.s32 %s24, %s31
    %s66 = sor.u32 %s64, %s65
    %p67 = scmp.eq.s32.totalorder %s66, 0
    %s69 = sadd.s32 %s68, 1
    %s70 = scalar_select %p67, %s68, %s69
    %p73 = pneg %p67
    %p74 = scmp.eq.s32.totalorder %s16, 3
    %p75 = por %p73, %p74
    %p76 = scmp.ne.s32.totalorder %s68, %s71
    %p77 = scmp.eq.s32.totalorder %s16, 0
    %p78 = por %p76, %p77
    %p79 = scmp.ne.s32.totalorder %s68, %s71
    %p80 = scmp.eq.s32.totalorder %s21, 3
    %p81 = por %p79, %p80
    %p82 = scmp.ne.s32.totalorder %s71, %s72
    %p83 = scmp.eq.s32.totalorder %s21, 0
    %p84 = por %p82, %p83
    %p85 = scmp.ne.s32.totalorder %s71, %s72
    %p86 = scmp.eq.s32.totalorder %s22, 3
    %p87 = por %p85, %p86
    %p89 = scmp.ne.s32.totalorder %s72, %s88
    %p90 = scmp.eq.s32.totalorder %s22, 0
    %p91 = por %p89, %p90
    %s93 = sadd.s32 %s92, 1
    %p96 = scmp.eq.s32.totalorder %s16, 3
    %p97 = scmp.ne.s32.totalorder %s92, %s94
    %p98 = scmp.eq.s32.totalorder %s16, 0
    %p99 = por %p97, %p98
    %p100 = scmp.ne.s32.totalorder %s92, %s94
    %p101 = scmp.eq.s32.totalorder %s21, 3
    %p102 = por %p100, %p101
    %p103 = scmp.ne.s32.totalorder %s94, %s95
    %p104 = scmp.eq.s32.totalorder %s21, 0
    %p105 = por %p103, %p104
    %p106 = scmp.ne.s32.totalorder %s94, %s95
    %p107 = scmp.eq.s32.totalorder %s22, 3
    %p108 = por %p106, %p107
    %p110 = scmp.ne.s32.totalorder %s95, %s109
    %p111 = scmp.eq.s32.totalorder %s22, 0
    %p112 = por %p110, %p111
    %s114 = sadd.s32 %s113, 1
    %p117 = scmp.eq.s32.totalorder %s16, 3
    %p118 = scmp.ne.s32.totalorder %s113, %s115
    %p119 = scmp.eq.s32.totalorder %s16, 0
    %p120 = por %p118, %p119
    %p121 = scmp.ne.s32.totalorder %s113, %s115
    %p122 = scmp.eq.s32.totalorder %s21, 3
    %p123 = por %p121, %p122
    %p124 = scmp.ne.s32.totalorder %s115, %s116
    %p125 = scmp.eq.s32.totalorder %s21, 0
    %p126 = por %p124, %p125
    %p127 = scmp.ne.s32.totalorder %s115, %s116
    %p128 = scmp.eq.s32.totalorder %s22, 3
    %p129 = por %p127, %p128
    %p131 = scmp.ne.s32.totalorder %s116, %s130
    %p132 = scmp.eq.s32.totalorder %s22, 0
    %p133 = por %p131, %p132
    %s135 = sadd.s32 %s134, 1
    %p138 = scmp.eq.s32.totalorder %s16, 3
    %p139 = scmp.ne.s32.totalorder %s134, %s136
    %p140 = scmp.eq.s32.totalorder %s16, 0
    %p141 = por %p139, %p140
    %p142 = scmp.ne.s32.totalorder %s134, %s136
    %p143 = scmp.eq.s32.totalorder %s21, 3
    %p144 = por %p142, %p143
    %p145 = scmp.ne.s32.totalorder %s136, %s137
    %p146 = scmp.eq.s32.totalorder %s21, 0
    %p147 = por %p145, %p146
    %p148 = scmp.ne.s32.totalorder %s136, %s137
    %p149 = scmp.eq.s32.totalorder %s22, 3
    %p150 = por %p148, %p149
    %p152 = scmp.ne.s32.totalorder %s137, %s151
    %p153 = scmp.eq.s32.totalorder %s22, 0
    %p154 = por %p152, %p153
    %s156 = sadd.s32 %s155, 1
    %p159 = scmp.eq.s32.totalorder %s16, 3
    %p160 = scmp.ne.s32.totalorder %s155, %s157
    %p161 = scmp.eq.s32.totalorder %s16, 0
    %p162 = por %p160, %p161
    %p163 = scmp.ne.s32.totalorder %s155, %s157
    %p164 = scmp.eq.s32.totalorder %s21, 3
    %p165 = por %p163, %p164
    %p166 = scmp.ne.s32.totalorder %s157, %s158
    %p167 = scmp.eq.s32.totalorder %s21, 0
    %p168 = por %p166, %p167
    %p169 = scmp.ne.s32.totalorder %s157, %s158
    %p170 = scmp.eq.s32.totalorder %s22, 3
    %p171 = por %p169, %p170
    %p173 = scmp.ne.s32.totalorder %s158, %s172
    %p174 = scmp.eq.s32.totalorder %s22, 0
    %p175 = por %p173, %p174
    %s177 = sadd.s32 %s176, 1
    %p180 = scmp.eq.s32.totalorder %s16, 3
    %p181 = scmp.ne.s32.totalorder %s176, %s178
    %p182 = scmp.eq.s32.totalorder %s16, 0
    %p183 = por %p181, %p182
    %p184 = scmp.ne.s32.totalorder %s176, %s178
    %p185 = scmp.eq.s32.totalorder %s21, 3
    %p186 = por %p184, %p185
    %p187 = scmp.ne.s32.totalorder %s178, %s179
    %p188 = scmp.eq.s32.totalorder %s21, 0
    %p189 = por %p187, %p188
    %p190 = scmp.ne.s32.totalorder %s178, %s179
    %p191 = scmp.eq.s32.totalorder %s22, 3
    %p192 = por %p190, %p191
    %p194 = scmp.ne.s32.totalorder %s179, %s193
    %p195 = scmp.eq.s32.totalorder %s22, 0
    %p196 = por %p194, %p195
    %s198 = sadd.s32 %s197, 1
    %p201 = scmp.eq.s32.totalorder %s16, 3
    %p202 = scmp.ne.s32.totalorder %s197, %s199
    %p203 = scmp.eq.s32.totalorder %s16, 0
    %p204 = por %p202, %p203
    %p205 = scmp.ne.s32.totalorder %s197, %s199
    %p206 = scmp.eq.s32.totalorder %s21, 3
    %p207 = por %p205, %p206
    %p208 = scmp.ne.s32.totalorder %s199, %s200
    %p209 = scmp.eq.s32.totalorder %s21, 0
    %p210 = por %p208, %p209
    %p211 = scmp.ne.s32.totalorder %s199, %s200
    %p212 = scmp.eq.s32.totalorder %s22, 3
    %p213 = por %p211, %p212
    %p215 = scmp.ne.s32.totalorder %s200, %s214
    %p216 = scmp.eq.s32.totalorder %s22, 0
    %p217 = por %p215, %p216
    %s219 = sadd.s32 %s218, 1
    %p222 = scmp.eq.s32.totalorder %s16, 3
    %p223 = scmp.ne.s32.totalorder %s218, %s220
    %p224 = scmp.eq.s32.totalorder %s16, 0
    %p225 = por %p223, %p224
    %p226 = scmp.ne.s32.totalorder %s218, %s220
    %p227 = scmp.eq.s32.totalorder %s21, 3
    %p228 = por %p226, %p227
    %p229 = scmp.ne.s32.totalorder %s220, %s221
    %p230 = scmp.eq.s32.totalorder %s21, 0
    %p231 = por %p229, %p230
    %p232 = scmp.ne.s32.totalorder %s220, %s221
    %p233 = scmp.eq.s32.totalorder %s22, 3
    %p234 = por %p232, %p233
    %p236 = scmp.ne.s32.totalorder %s221, %s235
    %p237 = scmp.eq.s32.totalorder %s22, 0
    %p238 = por %p236, %p237
    %s240 = sadd.s32 %s239, 1
    %p243 = scmp.eq.s32.totalorder %s16, 3
    %p244 = scmp.ne.s32.totalorder %s239, %s241
    %p245 = scmp.eq.s32.totalorder %s16, 0
    %p246 = por %p244, %p245
    %p247 = scmp.ne.s32.totalorder %s239, %s241
    %p248 = scmp.eq.s32.totalorder %s21, 3
    %p249 = por %p247, %p248
    %p250 = scmp.ne.s32.totalorder %s241, %s242
    %p251 = scmp.eq.s32.totalorder %s21, 0
    %p252 = por %p250, %p251
    %p253 = scmp.ne.s32.totalorder %s241, %s242
    %p254 = scmp.eq.s32.totalorder %s22, 3
    %p255 = por %p253, %p254
    %p257 = scmp.ne.s32.totalorder %s242, %s256
    %p258 = scmp.eq.s32.totalorder %s22, 0
    %p259 = por %p257, %p258
    %p260 = scmp.le.s32.totalorder 1, %s16
    %p261 = scmp.lt.s32.totalorder %s16, 5
    %p262 = pnand %p260, %p261
    %p263 = pneg %p262
    // Predicated region
    $region9: #{attention_block.3} parent=5 // pred_check
      _
    $region10: #{attention_block.3} parent=5 // pred_check_branch
      %265 = sbr.rel (%p262) target = $region12
    $region11: #{attention_block.3} parent=5 // pred_region
      %s266 = ssub.s32 %s16, 1
      // Predicated region
      $region13: #{attention_block.3} parent=11 // pred_check
        %p267 = pneg %p105
      $region14: #{attention_block.3} parent=11 // pred_check_branch
        %269 = sbr.rel (%p267) target = $region16
      $region15: #{attention_block.3} parent=11 // pred_region
        _
      $region16: #{attention_block.3} parent=11 // pred_fallthru
        _
      // Predicated region
      $region17: #{attention_block.3} parent=11 // pred_check
        %p270 = pneg %p126
      $region18: #{attention_block.3} parent=11 // pred_check_branch
        %272 = sbr.rel (%p270) target = $region20
      $region19: #{attention_block.3} parent=11 // pred_region
        _
      $region20: #{attention_block.3} parent=11 // pred_fallthru
        _
      // Predicated region
      $region21: #{attention_block.3} parent=11 // pred_check
        %p273 = pneg %p147
      $region22: #{attention_block.3} parent=11 // pred_check_branch
        %275 = sbr.rel (%p273) target = $region24
      $region23: #{attention_block.3} parent=11 // pred_region
        _
      $region24: #{attention_block.3} parent=11 // pred_fallthru
        _
      // Predicated region
      $region25: #{attention_block.3} parent=11 // pred_check
        %p276 = pneg %p168
      $region26: #{attention_block.3} parent=11 // pred_check_branch
        %278 = sbr.rel (%p276) target = $region28
      $region27: #{attention_block.3} parent=11 // pred_region
        _
      $region28: #{attention_block.3} parent=11 // pred_fallthru
        _
    $region12: #{attention_block.3} parent=5 // pred_fallthru
      _
    %p279 = scmp.lt.s32.totalorder %s16, 4
    // Predicated region
    $region29: #{attention_block.3} parent=5 // pred_check
      %p280 = pneg %p279
    $region30: #{attention_block.3} parent=5 // pred_check_branch
      %282 = sbr.rel (%p280) target = $region32
    $region31: #{attention_block.3} parent=5 // pred_region
      // Predicated region
      $region33: #{attention_block.3} parent=31 // pred_check
        %p283 = pneg %p50
      $region34: #{attention_block.3} parent=31 // pred_check_branch
        %285 = sbr.rel (%p283) target = $region36
      $region35: #{attention_block.3} parent=31 // pred_region
        %p286 = scmp.lt.s32.totalorder %s23, 1
        %s287 = scalar_select %p286, %s23, 1
        %p288 = scmp.lt.s32.totalorder %s24, 1
        %s289 = scalar_select %p288, %s24, 1
        %s290 = smul.addr %s287, 2
        %s291 = sadd.s32 %s289, %s290
        %s292 = smul.addr %s291, 4
        %s293 = scalar_lea.vmem %s0, %s292
      $region36: #{attention_block.3} parent=31 // pred_fallthru
        _
      // Predicated region
      $region37: #{attention_block.3} parent=31 // pred_check
        %p294 = pneg %p78
      $region38: #{attention_block.3} parent=31 // pred_check_branch
        %296 = sbr.rel (%p294) target = $region40
      $region39: #{attention_block.3} parent=31 // pred_region
        %p297 = scmp.lt.s32.totalorder %s23, 1
        %s298 = scalar_select %p297, %s23, 1
        %p299 = scmp.lt.s32.totalorder %s24, 1
        %s300 = scalar_select %p299, %s24, 1
        %s301 = smul.addr %s298, 2
        %s302 = sadd.s32 %s300, %s301
        %s303 = smul.addr %s302, 4
        %s304 = scalar_lea.vmem %s1, %s303
      $region40: #{attention_block.3} parent=31 // pred_fallthru
        _
    $region32: #{attention_block.3} parent=5 // pred_fallthru
      _
    %p305 = scmp.le.s32.totalorder 1, %s16
    %p306 = scmp.lt.s32.totalorder %s16, 5
    %p307 = pnand %p305, %p306
    %p308 = pneg %p307
    // Predicated region
    $region41: #{attention_block.3} parent=5 // pred_check
      _
    $region42: #{attention_block.3} parent=5 // pred_check_branch
      %310 = sbr.rel (%p307) target = $region44
    $region43: #{attention_block.3} parent=5 // pred_region
      %s311 = ssub.s32 %s16, 1
      %p312 = scmp.lt.s32.totalorder %s25, 1
      %s313 = scalar_select %p312, %s25, 1
      %p314 = scmp.lt.s32.totalorder %s26, 1
      %s315 = scalar_select %p314, %s26, 1
      %s316 = smul.addr %s313, 2
      %s317 = sadd.s32 %s315, %s316
      %s318 = smul.addr %s317, 4
      %s319 = scalar_lea.vmem %s0, %s318
      %p320 = pneg %p56
      %p321 = pneg %p53
      %p322 = scmp.lt.s32.totalorder %s25, 1
      %s323 = scalar_select %p322, %s25, 1
      %p324 = scmp.lt.s32.totalorder %s26, 1
      %s325 = scalar_select %p324, %s26, 1
      %s326 = smul.addr %s323, 2
      %s327 = sadd.s32 %s325, %s326
      %s328 = smul.addr %s327, 4
      %s329 = scalar_lea.vmem %s1, %s328
      %p330 = pneg %p84
      %p331 = pneg %p81
      %p332 = pneg %p105
      %p333 = pneg %p102
      %p334 = pneg %p126
      %p335 = pneg %p123
      %p336 = pneg %p147
      %p337 = pneg %p144
      %p338 = pneg %p168
      %p339 = pneg %p165
      %p340 = pneg %p189
      %p341 = pneg %p186
      %p342 = pneg %p210
      %p343 = pneg %p207
      %p344 = pneg %p231
      %p345 = pneg %p228
      %p346 = pneg %p252
      %p347 = pneg %p249
      %p348 = scmp.lt.s32.totalorder %s25, 1
      %s349 = scalar_select %p348, %s25, 1
      %p350 = scmp.lt.s32.totalorder %s26, 1
      %s351 = scalar_select %p350, %s26, 1
      %s352 = smul.addr %s349, 2
      %s353 = sadd.s32 %s351, %s352
      %s354 = smul.addr %s353, 4
      %s355 = scalar_lea.vmem %s0, %s354
      %p356 = scmp.lt.s32.totalorder %s25, 1
      %s357 = scalar_select %p356, %s25, 1
      %p358 = scmp.lt.s32.totalorder %s26, 1
      %s359 = scalar_select %p358, %s26, 1
      %s360 = smul.addr %s357, 2
      %s361 = sadd.s32 %s359, %s360
      %s362 = smul.addr %s361, 4
      %s363 = scalar_lea.vmem %s1, %s362
      %p364 = scmp.eq.s32.totalorder %s25, 0
      %p365 = scmp.eq.s32.totalorder %s26, 0
      %p366 = pnand %p364, %p365
      %p367 = pneg %p366
      // Predicated region
      $region45: #{attention_block.3} parent=43 // pred_check
        _
      $region46: #{attention_block.3} parent=43 // pred_check_branch
        %369 = sbr.rel (%p366) target = $region48
      $region47: #{attention_block.3} parent=43 // pred_region
        %vm370 = vcmask 7168
        %371 = vst.msk [vmem:[%s6] sm:$0xff] %vm370, 0.0
        %372 = vst.msk [vmem:[%s7] sm:$0xff] %vm370, 0.0
        %373 = vst.msk [vmem:[%s8] sm:$0xff] %vm370, 0.0
        %374 = vst.msk [vmem:[%s9] sm:$0xff] %vm370, 0.0
      $region48: #{attention_block.3} parent=43 // pred_fallthru
        _
      %v375 = vld [vmem:[%s2] sm:$0xff]
      %v376 = vld [vmem:[%s355] sm:$0xf]
      %v377 = vld [vmem:[%s4] sm:$0xff]
      %379 = vset.pattern.permute.xlu0 0
      %380 = vperm.xlu0 %379, %v377
      %v381 = vpop.permute.xlu0 %380
      %vm383 = vcmask 31744
      %v385 = vsel %vm383, %v375, 0
      %vm387 = vcmask 1043456
      %v389 = vsel %vm387, %v376, 0
      %391 = vmatpush.msra.mxu0 0.0
      %392 = vmatpush.msra.mxu0 0.0
      %393 = vmatpush.msra.mxu0 0.0
      %394 = vmatpush.msra.mxu0 0.0
      %395 = vmatpush.msra.mxu0 0.0
      %396 = vmatpush.msra.mxu0 0.0
      %397 = vmatpush.msra.mxu0 0.0
      %398 = vmatpush.msra.mxu0 0.0
      %399 = vmatpush.msra.mxu0 0.0
      %400 = vmatpush.msra.mxu0 0.0
      %401 = vmatpush.msra.mxu0 0.0
      %402 = vmatpush.msra.mxu0 0.0
      %403 = vmatpush.msra.mxu0 0.0
      %404 = vmatpush.msra.mxu0 0.0
      %405 = vmatpush.msra.mxu0 0.0
      %406 = vmatpush.msra.mxu0 %v389
      %407 = vmatmul.f32.gmra.mxu0 %v385
      %v408 = vpop.f32.mrf.mxu0
      %v409 = vadd.f32 %v381, %v408
      %410 = vdwg.mxu0
      %v411 = vld [vmem:[%s3] sm:$0xff]
      %v412 = vld [vmem:[%s363] sm:$0xf]
      %v413 = vld [vmem:[%s5] sm:$0xff]
      %415 = vset.pattern.permute.xlu0 0
      %416 = vperm.xlu0 %415, %v413
      %v417 = vpop.permute.xlu0 %416
      %v420 = vsel %vm383, %v411, 0
      %v423 = vsel %vm387, %v412, 0
      %425 = vmatpush.msra.mxu0 0.0
      %426 = vmatpush.msra.mxu0 0.0
      %427 = vmatpush.msra.mxu0 0.0
      %428 = vmatpush.msra.mxu0 0.0
      %429 = vmatpush.msra.mxu0 0.0
      %430 = vmatpush.msra.mxu0 0.0
      %431 = vmatpush.msra.mxu0 0.0
      %432 = vmatpush.msra.mxu0 0.0
      %433 = vmatpush.msra.mxu0 0.0
      %434 = vmatpush.msra.mxu0 0.0
      %435 = vmatpush.msra.mxu0 0.0
      %436 = vmatpush.msra.mxu0 0.0
      %437 = vmatpush.msra.mxu0 0.0
      %438 = vmatpush.msra.mxu0 0.0
      %439 = vmatpush.msra.mxu0 0.0
      %440 = vmatpush.msra.mxu0 %v423
      %441 = vmatmul.f32.gmra.mxu0 %v420
      %v442 = vpop.f32.mrf.mxu0
      %v443 = vadd.f32 %v417, %v442
      %444 = vdwg.mxu0
      %v445 = vld [vmem:[%s6] sm:$0xff]
      %446 = vadd.xlane.f32.xlu0 %v409
      %v447 = vpop.xlane.xlu0 %446
      %v448 = vadd.f32 %v445, %v447
      %vm449 = vcmask 7168
      %450 = vst.msk [vmem:[%s6] sm:$0xff] %vm449, %v448
      %v451 = vld [vmem:[%s7] sm:$0xff]
      %v452 = vmul.f32 %v409, %v409
      %453 = vadd.xlane.f32.xlu0 %v452
      %v454 = vpop.xlane.xlu0 %453
      %v455 = vadd.f32 %v451, %v454
      %456 = vst.msk [vmem:[%s7] sm:$0xff] %vm449, %v455
      %v457 = vld [vmem:[%s8] sm:$0xff]
      %458 = vadd.xlane.f32.xlu0 %v443
      %v459 = vpop.xlane.xlu0 %458
      %v460 = vadd.f32 %v457, %v459
      %461 = vst.msk [vmem:[%s8] sm:$0xff] %vm449, %v460
      %v462 = vld [vmem:[%s9] sm:$0xff]
      %v463 = vmul.f32 %v443, %v443
      %464 = vadd.xlane.f32.xlu0 %v463
      %v465 = vpop.xlane.xlu0 %464
      %v466 = vadd.f32 %v462, %v465
      %467 = vst.msk [vmem:[%s9] sm:$0xff] %vm449, %v466
      // Predicated region
      $region49: #{attention_block.3} parent=43 // pred_check
        %p468 = pneg %p186
      $region50: #{attention_block.3} parent=43 // pred_check_branch
        %470 = sbr.rel (%p468) target = $region52
      $region51: #{attention_block.3} parent=43 // pred_region
        _
      $region52: #{attention_block.3} parent=43 // pred_fallthru
        _
      // Predicated region
      $region53: #{attention_block.3} parent=43 // pred_check
        %p471 = pneg %p207
      $region54: #{attention_block.3} parent=43 // pred_check_branch
        %473 = sbr.rel (%p471) target = $region56
      $region55: #{attention_block.3} parent=43 // pred_region
        _
      $region56: #{attention_block.3} parent=43 // pred_fallthru
        _
      // Predicated region
      $region57: #{attention_block.3} parent=43 // pred_check
        %p474 = pneg %p228
      $region58: #{attention_block.3} parent=43 // pred_check_branch
        %476 = sbr.rel (%p474) target = $region60
      $region59: #{attention_block.3} parent=43 // pred_region
        _
      $region60: #{attention_block.3} parent=43 // pred_fallthru
        _
      // Predicated region
      $region61: #{attention_block.3} parent=43 // pred_check
        %p477 = pneg %p249
      $region62: #{attention_block.3} parent=43 // pred_check_branch
        %479 = sbr.rel (%p477) target = $region64
      $region63: #{attention_block.3} parent=43 // pred_region
        _
      $region64: #{attention_block.3} parent=43 // pred_fallthru
        _
      // Predicated region
      $region65: #{attention_block.3} parent=43 // pred_check
        %p480 = pneg %p186
      $region66: #{attention_block.3} parent=43 // pred_check_branch
        %482 = sbr.rel (%p480) target = $region68
      $region67: #{attention_block.3} parent=43 // pred_region
        _
      $region68: #{attention_block.3} parent=43 // pred_fallthru
        _
      // Predicated region
      $region69: #{attention_block.3} parent=43 // pred_check
        %p483 = pneg %p207
      $region70: #{attention_block.3} parent=43 // pred_check_branch
        %485 = sbr.rel (%p483) target = $region72
      $region71: #{attention_block.3} parent=43 // pred_region
        _
      $region72: #{attention_block.3} parent=43 // pred_fallthru
        _
      // Predicated region
      $region73: #{attention_block.3} parent=43 // pred_check
        %p486 = pneg %p228
      $region74: #{attention_block.3} parent=43 // pred_check_branch
        %488 = sbr.rel (%p486) target = $region76
      $region75: #{attention_block.3} parent=43 // pred_region
        _
      $region76: #{attention_block.3} parent=43 // pred_fallthru
        _
      // Predicated region
      $region77: #{attention_block.3} parent=43 // pred_check
        %p489 = pneg %p249
      $region78: #{attention_block.3} parent=43 // pred_check_branch
        %491 = sbr.rel (%p489) target = $region80
      $region79: #{attention_block.3} parent=43 // pred_region
        _
      $region80: #{attention_block.3} parent=43 // pred_fallthru
        _
    $region44: #{attention_block.3} parent=5 // pred_fallthru
      _
    %p492 = scmp.le.s32.totalorder 2, %s16
    // Predicated region
    $region81: #{attention_block.3} parent=5 // pred_check
      %p493 = pneg %p492
    $region82: #{attention_block.3} parent=5 // pred_check_branch
      %495 = sbr.rel (%p493) target = $region84
    $region83: #{attention_block.3} parent=5 // pred_region
      %s496 = ssub.s32 %s16, 2
    $region84: #{attention_block.3} parent=5 // pred_fallthru
      _
  $region6: #{attention_block.3} parent=0 // loop_footer
    %s20 = sadd.s32 1, %s16
  $region7: #{attention_block.3} parent=0 // loop_footer_branch
    %15 = sbr.rel target = $region3
  $region8: #{attention_block.3} parent=0 // loop_exit
    _

// kernel: attention_block.4
$region0: #{attention_block.4}
  #allocation0 [shape = 'u32[]', space=smem, size = 0x4, offset = 0x4, fixed_abs, tag = 'smem constant byte address 0x4 - core index']
  #allocation1 [shape = 'u32[72,128]{1,0:T(1,128)}', space=vmem, size = 0x9000, scoped, tag = 'internal scratch']
  #allocation2 [shape = 'f32[1,1]{1,0:T(1,128)S(1)}', space=vmem, size = 0x200, scoped, tag = 'scoped memory for attention_block.4']
  %s0 = inlined_call_operand.vmem [shape: f32[2,4,256], index: 0, kind: input, shape index: {}]
  %s1 = inlined_call_operand.vmem [shape: f32[2,4,256], index: 1, kind: input, shape index: {}]
  %s2 = inlined_call_operand.vmem [shape: f32[8,4], index: 2, kind: input, shape index: {}]
  %s3 = inlined_call_operand.vmem [shape: f32[8,4], index: 3, kind: input, shape index: {}]
  %s4 = inlined_call_operand.vmem [shape: f32[8,1], index: 4, kind: input, shape index: {}]
  %s5 = inlined_call_operand.vmem [shape: f32[8,1], index: 5, kind: input, shape index: {}]
  %s6 = inlined_call_operand.vmem [shape: f32[8,1], index: 6, kind: input, shape index: {}]
  %s7 = inlined_call_operand.vmem [shape: f32[8,1], index: 7, kind: input, shape index: {}]
  %s8 = inlined_call_operand.vmem [shape: f32[8,1], index: 8, kind: input, shape index: {}]
  %s9 = inlined_call_operand.vmem [shape: f32[8,1], index: 9, kind: input, shape index: {}]
  %s10 = inlined_call_operand.vmem [shape: f32[8,1], index: 10, kind: input, shape index: {}]
  %s11 = inlined_call_operand.<no memory space> [shape: f32[1,1], index: 11, kind: input, shape index: {}]
  %s12 = inlined_call_operand.vmem [shape: f32[2,1,256], index: 12, kind: output, shape index: {}]
  %s13 = sld [smem:[#allocation0]]
  $region81: #{attention_block.4} parent=0
    _
  %s15 = ssub.s32 1, %s13
  %s16 = scalar_select 0, %s15, %s13
  %v17 = vstv %s11
  %18 = vst [vmem:[#allocation2] sm:$0x1] %v17
  loop: start=0, step=1, limit=6
  $region2: #{attention_block.4} parent=0 // loop_pre_header
    _
  $region3: #{attention_block.4} parent=0 // loop_header
    %s20 = sphi 0, %s24
    %p21 = scmp.ge.s32.totalorder %s20, 6
    %s27 = sphi 0, %s39
    %s28 = sphi 0, %s35
    %s29 = sphi 0, %s27
    %s30 = sphi 0, %s28
    %s31 = sphi 0, %s29
    %s32 = sphi 0, %s30
    %s44 = sphi 0, %s46
    %s47 = sphi 0, %s44
    %s48 = sphi 0, %s47
    %s64 = sphi 0, %s48
    %s72 = sphi 0, %s74
    %s75 = sphi 0, %s72
    %s76 = sphi 0, %s75
    %s92 = sphi 0, %s76
    %s96 = sphi 0, %s96
    %s98 = sphi 0, %s96
    %s99 = sphi 0, %s98
    %s113 = sphi 0, %s99
    %s117 = sphi 0, %s117
    %s119 = sphi 0, %s117
    %s120 = sphi 0, %s119
    %s134 = sphi 0, %s120
    %s138 = sphi 0, %s138
    %s140 = sphi 0, %s138
    %s141 = sphi 0, %s140
    %s155 = sphi 0, %s141
    %s159 = sphi 0, %s159
    %s161 = sphi 0, %s159
    %s162 = sphi 0, %s161
    %s176 = sphi 0, %s162
    %s180 = sphi 0, %s180
    %s182 = sphi 0, %s180
    %s183 = sphi 0, %s182
    %s197 = sphi 0, %s183
    %s201 = sphi 0, %s201
    %s203 = sphi 0, %s201
    %s204 = sphi 0, %s203
    %s218 = sphi 0, %s204
    %s222 = sphi 0, %s222
    %s224 = sphi 0, %s222
    %s225 = sphi 0, %s224
    %s239 = sphi 0, %s225
    %s243 = sphi 0, %s243
    %s245 = sphi 0, %s243
    %s246 = sphi 0, %s245
    %s260 = sphi 0, %s246
    %s264 = sphi 0, %s264
    %s266 = sphi 0, %s264
    %s267 = sphi 0, %s266
    %s281 = sphi 0, %s267
    %s285 = sphi 0, %s285
    %s287 = sphi 0, %s285
    %s288 = sphi 0, %s287
    %s302 = sphi 0, %s288
    %s310 = sphi 0, %s312
    %s313 = sphi 0, %s310
    %s314 = sphi 0, %s313
    %s330 = sphi 0, %s314
  $region4: #{attention_block.4} parent=0 // loop_header_branch
    %23 = sbr.rel (%p21) target = $region8
  $region5: #{attention_block.4} parent=0 // loop_body
    %s25 = ssub.s32 %s20, 1
    %s26 = ssub.s32 %s20, 2
    %s33 = sadd.s32 1, %s28
    %p34 = scmp.ge.s32.totalorder %s33, 2
    %s35 = scalar_select %p34, 0, %s33
    %s36 = sadd.s32 1, %s27
    %s37 = scalar_select %p34, %s36, %s27
    %p38 = scmp.ge.s32.totalorder %s37, 2
    %s39 = scalar_select %p38, 0, %s37
    %s40 = ssub.s32 %s27, %s39
    %s41 = ssub.s32 %s28, %s35
    %s42 = sor.u32 %s40, %s41
    %p43 = scmp.eq.s32.totalorder %s42, 0
    %s45 = sadd.s32 %s44, 1
    %s46 = scalar_select %p43, %s44, %s45
    %p49 = pneg %p43
    %p50 = scmp.eq.s32.totalorder %s20, 3
    %p51 = por %p49, %p50
    %p52 = scmp.ne.s32.totalorder %s44, %s47
    %p53 = scmp.eq.s32.totalorder %s20, 0
    %p54 = por %p52, %p53
    %p55 = scmp.ne.s32.totalorder %s44, %s47
    %p56 = scmp.eq.s32.totalorder %s25, 3
    %p57 = por %p55, %p56
    %p58 = scmp.ne.s32.totalorder %s47, %s48
    %p59 = scmp.eq.s32.totalorder %s25, 0
    %p60 = por %p58, %p59
    %p61 = scmp.ne.s32.totalorder %s47, %s48
    %p62 = scmp.eq.s32.totalorder %s26, 3
    %p63 = por %p61, %p62
    %p65 = scmp.ne.s32.totalorder %s48, %s64
    %p66 = scmp.eq.s32.totalorder %s26, 0
    %p67 = por %p65, %p66
    %s68 = ssub.s32 %s27, %s39
    %s69 = ssub.s32 %s28, %s35
    %s70 = sor.u32 %s68, %s69
    %p71 = scmp.eq.s32.totalorder %s70, 0
    %s73 = sadd.s32 %s72, 1
    %s74 = scalar_select %p71, %s72, %s73
    %p77 = pneg %p71
    %p78 = scmp.eq.s32.totalorder %s20, 3
    %p79 = por %p77, %p78
    %p80 = scmp.ne.s32.totalorder %s72, %s75
    %p81 = scmp.eq.s32.totalorder %s20, 0
    %p82 = por %p80, %p81
    %p83 = scmp.ne.s32.totalorder %s72, %s75
    %p84 = scmp.eq.s32.totalorder %s25, 3
    %p85 = por %p83, %p84
    %p86 = scmp.ne.s32.totalorder %s75, %s76
    %p87 = scmp.eq.s32.totalorder %s25, 0
    %p88 = por %p86, %p87
    %p89 = scmp.ne.s32.totalorder %s75, %s76
    %p90 = scmp.eq.s32.totalorder %s26, 3
    %p91 = por %p89, %p90
    %p93 = scmp.ne.s32.totalorder %s76, %s92
    %p94 = scmp.eq.s32.totalorder %s26, 0
    %p95 = por %p93, %p94
    %s97 = sadd.s32 %s96, 1
    %p100 = scmp.eq.s32.totalorder %s20, 3
    %p101 = scmp.ne.s32.totalorder %s96, %s98
    %p102 = scmp.eq.s32.totalorder %s20, 0
    %p103 = por %p101, %p102
    %p104 = scmp.ne.s32.totalorder %s96, %s98
    %p105 = scmp.eq.s32.totalorder %s25, 3
    %p106 = por %p104, %p105
    %p107 = scmp.ne.s32.totalorder %s98, %s99
    %p108 = scmp.eq.s32.totalorder %s25, 0
    %p109 = por %p107, %p108
    %p110 = scmp.ne.s32.totalorder %s98, %s99
    %p111 = scmp.eq.s32.totalorder %s26, 3
    %p112 = por %p110, %p111
    %p114 = scmp.ne.s32.totalorder %s99, %s113
    %p115 = scmp.eq.s32.totalorder %s26, 0
    %p116 = por %p114, %p115
    %s118 = sadd.s32 %s117, 1
    %p121 = scmp.eq.s32.totalorder %s20, 3
    %p122 = scmp.ne.s32.totalorder %s117, %s119
    %p123 = scmp.eq.s32.totalorder %s20, 0
    %p124 = por %p122, %p123
    %p125 = scmp.ne.s32.totalorder %s117, %s119
    %p126 = scmp.eq.s32.totalorder %s25, 3
    %p127 = por %p125, %p126
    %p128 = scmp.ne.s32.totalorder %s119, %s120
    %p129 = scmp.eq.s32.totalorder %s25, 0
    %p130 = por %p128, %p129
    %p131 = scmp.ne.s32.totalorder %s119, %s120
    %p132 = scmp.eq.s32.totalorder %s26, 3
    %p133 = por %p131, %p132
    %p135 = scmp.ne.s32.totalorder %s120, %s134
    %p136 = scmp.eq.s32.totalorder %s26, 0
    %p137 = por %p135, %p136
    %s139 = sadd.s32 %s138, 1
    %p142 = scmp.eq.s32.totalorder %s20, 3
    %p143 = scmp.ne.s32.totalorder %s138, %s140
    %p144 = scmp.eq.s32.totalorder %s20, 0
    %p145 = por %p143, %p144
    %p146 = scmp.ne.s32.totalorder %s138, %s140
    %p147 = scmp.eq.s32.totalorder %s25, 3
    %p148 = por %p146, %p147
    %p149 = scmp.ne.s32.totalorder %s140, %s141
    %p150 = scmp.eq.s32.totalorder %s25, 0
    %p151 = por %p149, %p150
    %p152 = scmp.ne.s32.totalorder %s140, %s141
    %p153 = scmp.eq.s32.totalorder %s26, 3
    %p154 = por %p152, %p153
    %p156 = scmp.ne.s32.totalorder %s141, %s155
    %p157 = scmp.eq.s32.totalorder %s26, 0
    %p158 = por %p156, %p157
    %s160 = sadd.s32 %s159, 1
    %p163 = scmp.eq.s32.totalorder %s20, 3
    %p164 = scmp.ne.s32.totalorder %s159, %s161
    %p165 = scmp.eq.s32.totalorder %s20, 0
    %p166 = por %p164, %p165
    %p167 = scmp.ne.s32.totalorder %s159, %s161
    %p168 = scmp.eq.s32.totalorder %s25, 3
    %p169 = por %p167, %p168
    %p170 = scmp.ne.s32.totalorder %s161, %s162
    %p171 = scmp.eq.s32.totalorder %s25, 0
    %p172 = por %p170, %p171
    %p173 = scmp.ne.s32.totalorder %s161, %s162
    %p174 = scmp.eq.s32.totalorder %s26, 3
    %p175 = por %p173, %p174
    %p177 = scmp.ne.s32.totalorder %s162, %s176
    %p178 = scmp.eq.s32.totalorder %s26, 0
    %p179 = por %p177, %p178
    %s181 = sadd.s32 %s180, 1
    %p184 = scmp.eq.s32.totalorder %s20, 3
    %p185 = scmp.ne.s32.totalorder %s180, %s182
    %p186 = scmp.eq.s32.totalorder %s20, 0
    %p187 = por %p185, %p186
    %p188 = scmp.ne.s32.totalorder %s180, %s182
    %p189 = scmp.eq.s32.totalorder %s25, 3
    %p190 = por %p188, %p189
    %p191 = scmp.ne.s32.totalorder %s182, %s183
    %p192 = scmp.eq.s32.totalorder %s25, 0
    %p193 = por %p191, %p192
    %p194 = scmp.ne.s32.totalorder %s182, %s183
    %p195 = scmp.eq.s32.totalorder %s26, 3
    %p196 = por %p194, %p195
    %p198 = scmp.ne.s32.totalorder %s183, %s197
    %p199 = scmp.eq.s32.totalorder %s26, 0
    %p200 = por %p198, %p199
    %s202 = sadd.s32 %s201, 1
    %p205 = scmp.eq.s32.totalorder %s20, 3
    %p206 = scmp.ne.s32.totalorder %s201, %s203
    %p207 = scmp.eq.s32.totalorder %s20, 0
    %p208 = por %p206, %p207
    %p209 = scmp.ne.s32.totalorder %s201, %s203
    %p210 = scmp.eq.s32.totalorder %s25, 3
    %p211 = por %p209, %p210
    %p212 = scmp.ne.s32.totalorder %s203, %s204
    %p213 = scmp.eq.s32.totalorder %s25, 0
    %p214 = por %p212, %p213
    %p215 = scmp.ne.s32.totalorder %s203, %s204
    %p216 = scmp.eq.s32.totalorder %s26, 3
    %p217 = por %p215, %p216
    %p219 = scmp.ne.s32.totalorder %s204, %s218
    %p220 = scmp.eq.s32.totalorder %s26, 0
    %p221 = por %p219, %p220
    %s223 = sadd.s32 %s222, 1
    %p226 = scmp.eq.s32.totalorder %s20, 3
    %p227 = scmp.ne.s32.totalorder %s222, %s224
    %p228 = scmp.eq.s32.totalorder %s20, 0
    %p229 = por %p227, %p228
    %p230 = scmp.ne.s32.totalorder %s222, %s224
    %p231 = scmp.eq.s32.totalorder %s25, 3
    %p232 = por %p230, %p231
    %p233 = scmp.ne.s32.totalorder %s224, %s225
    %p234 = scmp.eq.s32.totalorder %s25, 0
    %p235 = por %p233, %p234
    %p236 = scmp.ne.s32.totalorder %s224, %s225
    %p237 = scmp.eq.s32.totalorder %s26, 3
    %p238 = por %p236, %p237
    %p240 = scmp.ne.s32.totalorder %s225, %s239
    %p241 = scmp.eq.s32.totalorder %s26, 0
    %p242 = por %p240, %p241
    %s244 = sadd.s32 %s243, 1
    %p247 = scmp.eq.s32.totalorder %s20, 3
    %p248 = scmp.ne.s32.totalorder %s243, %s245
    %p249 = scmp.eq.s32.totalorder %s20, 0
    %p250 = por %p248, %p249
    %p251 = scmp.ne.s32.totalorder %s243, %s245
    %p252 = scmp.eq.s32.totalorder %s25, 3
    %p253 = por %p251, %p252
    %p254 = scmp.ne.s32.totalorder %s245, %s246
    %p255 = scmp.eq.s32.totalorder %s25, 0
    %p256 = por %p254, %p255
    %p257 = scmp.ne.s32.totalorder %s245, %s246
    %p258 = scmp.eq.s32.totalorder %s26, 3
    %p259 = por %p257, %p258
    %p261 = scmp.ne.s32.totalorder %s246, %s260
    %p262 = scmp.eq.s32.totalorder %s26, 0
    %p263 = por %p261, %p262
    %s265 = sadd.s32 %s264, 1
    %p268 = scmp.eq.s32.totalorder %s20, 3
    %p269 = scmp.ne.s32.totalorder %s264, %s266
    %p270 = scmp.eq.s32.totalorder %s20, 0
    %p271 = por %p269, %p270
    %p272 = scmp.ne.s32.totalorder %s264, %s266
    %p273 = scmp.eq.s32.totalorder %s25, 3
    %p274 = por %p272, %p273
    %p275 = scmp.ne.s32.totalorder %s266, %s267
    %p276 = scmp.eq.s32.totalorder %s25, 0
    %p277 = por %p275, %p276
    %p278 = scmp.ne.s32.totalorder %s266, %s267
    %p279 = scmp.eq.s32.totalorder %s26, 3
    %p280 = por %p278, %p279
    %p282 = scmp.ne.s32.totalorder %s267, %s281
    %p283 = scmp.eq.s32.totalorder %s26, 0
    %p284 = por %p282, %p283
    %s286 = sadd.s32 %s285, 1
    %p289 = scmp.eq.s32.totalorder %s20, 3
    %p290 = scmp.ne.s32.totalorder %s285, %s287
    %p291 = scmp.eq.s32.totalorder %s20, 0
    %p292 = por %p290, %p291
    %p293 = scmp.ne.s32.totalorder %s285, %s287
    %p294 = scmp.eq.s32.totalorder %s25, 3
    %p295 = por %p293, %p294
    %p296 = scmp.ne.s32.totalorder %s287, %s288
    %p297 = scmp.eq.s32.totalorder %s25, 0
    %p298 = por %p296, %p297
    %p299 = scmp.ne.s32.totalorder %s287, %s288
    %p300 = scmp.eq.s32.totalorder %s26, 3
    %p301 = por %p299, %p300
    %p303 = scmp.ne.s32.totalorder %s288, %s302
    %p304 = scmp.eq.s32.totalorder %s26, 0
    %p305 = por %p303, %p304
    %s306 = ssub.s32 %s27, %s39
    %s307 = ssub.s32 %s28, %s35
    %s308 = sor.u32 %s306, %s307
    %p309 = scmp.eq.s32.totalorder %s308, 0
    %s311 = sadd.s32 %s310, 1
    %s312 = scalar_select %p309, %s310, %s311
    %p315 = pneg %p309
    %p316 = scmp.eq.s32.totalorder %s20, 3
    %p317 = por %p315, %p316
    %p318 = scmp.ne.s32.totalorder %s310, %s313
    %p319 = scmp.eq.s32.totalorder %s20, 0
    %p320 = por %p318, %p319
    %p321 = scmp.ne.s32.totalorder %s310, %s313
    %p322 = scmp.eq.s32.totalorder %s25, 3
    %p323 = por %p321, %p322
    %p324 = scmp.ne.s32.totalorder %s313, %s314
    %p325 = scmp.eq.s32.totalorder %s25, 0
    %p326 = por %p324, %p325
    %p327 = scmp.ne.s32.totalorder %s313, %s314
    %p328 = scmp.eq.s32.totalorder %s26, 3
    %p329 = por %p327, %p328
    %p331 = scmp.ne.s32.totalorder %s314, %s330
    %p332 = scmp.eq.s32.totalorder %s26, 0
    %p333 = por %p331, %p332
    %p334 = scmp.le.s32.totalorder 1, %s20
    %p335 = scmp.lt.s32.totalorder %s20, 5
    %p336 = pnand %p334, %p335
    %p337 = pneg %p336
    // Predicated region
    $region9: #{attention_block.4} parent=5 // pred_check
      _
    $region10: #{attention_block.4} parent=5 // pred_check_branch
      %339 = sbr.rel (%p336) target = $region12
    $region11: #{attention_block.4} parent=5 // pred_region
      %s340 = ssub.s32 %s20, 1
      // Predicated region
      $region13: #{attention_block.4} parent=11 // pred_check
        %p341 = pneg %p109
      $region14: #{attention_block.4} parent=11 // pred_check_branch
        %343 = sbr.rel (%p341) target = $region16
      $region15: #{attention_block.4} parent=11 // pred_region
        _
      $region16: #{attention_block.4} parent=11 // pred_fallthru
        _
      // Predicated region
      $region17: #{attention_block.4} parent=11 // pred_check
        %p344 = pneg %p130
      $region18: #{attention_block.4} parent=11 // pred_check_branch
        %346 = sbr.rel (%p344) target = $region20
      $region19: #{attention_block.4} parent=11 // pred_region
        _
      $region20: #{attention_block.4} parent=11 // pred_fallthru
        _
      // Predicated region
      $region21: #{attention_block.4} parent=11 // pred_check
        %p347 = pneg %p151
      $region22: #{attention_block.4} parent=11 // pred_check_branch
        %349 = sbr.rel (%p347) target = $region24
      $region23: #{attention_block.4} parent=11 // pred_region
        _
      $region24: #{attention_block.4} parent=11 // pred_fallthru
        _
      // Predicated region
      $region25: #{attention_block.4} parent=11 // pred_check
        %p350 = pneg %p172
      $region26: #{attention_block.4} parent=11 // pred_check_branch
        %352 = sbr.rel (%p350) target = $region28
      $region27: #{attention_block.4} parent=11 // pred_region
        _
      $region28: #{attention_block.4} parent=11 // pred_fallthru
        _
      // Predicated region
      $region29: #{attention_block.4} parent=11 // pred_check
        %p353 = pneg %p193
      $region30: #{attention_block.4} parent=11 // pred_check_branch
        %355 = sbr.rel (%p353) target = $region32
      $region31: #{attention_block.4} parent=11 // pred_region
        _
      $region32: #{attention_block.4} parent=11 // pred_fallthru
        _
      // Predicated region
      $region33: #{attention_block.4} parent=11 // pred_check
        %p356 = pneg %p214
      $region34: #{attention_block.4} parent=11 // pred_check_branch
        %358 = sbr.rel (%p356) target = $region36
      $region35: #{attention_block.4} parent=11 // pred_region
        _
      $region36: #{attention_block.4} parent=11 // pred_fallthru
        _
      // Predicated region
      $region37: #{attention_block.4} parent=11 // pred_check
        %p359 = pneg %p235
      $region38: #{attention_block.4} parent=11 // pred_check_branch
        %361 = sbr.rel (%p359) target = $region40
      $region39: #{attention_block.4} parent=11 // pred_region
        _
      $region40: #{attention_block.4} parent=11 // pred_fallthru
        _
      // Predicated region
      $region41: #{attention_block.4} parent=11 // pred_check
        %p362 = pneg %p256
      $region42: #{attention_block.4} parent=11 // pred_check_branch
        %364 = sbr.rel (%p362) target = $region44
      $region43: #{attention_block.4} parent=11 // pred_region
        _
      $region44: #{attention_block.4} parent=11 // pred_fallthru
        _
      // Predicated region
      $region45: #{attention_block.4} parent=11 // pred_check
        %p365 = pneg %p277
      $region46: #{attention_block.4} parent=11 // pred_check_branch
        %367 = sbr.rel (%p365) target = $region48
      $region47: #{attention_block.4} parent=11 // pred_region
        _
      $region48: #{attention_block.4} parent=11 // pred_fallthru
        _
      // Predicated region
      $region49: #{attention_block.4} parent=11 // pred_check
        %p368 = pneg %p298
      $region50: #{attention_block.4} parent=11 // pred_check_branch
        %370 = sbr.rel (%p368) target = $region52
      $region51: #{attention_block.4} parent=11 // pred_region
        _
      $region52: #{attention_block.4} parent=11 // pred_fallthru
        _
    $region12: #{attention_block.4} parent=5 // pred_fallthru
      _
    %p371 = scmp.lt.s32.totalorder %s20, 4
    // Predicated region
    $region53: #{attention_block.4} parent=5 // pred_check
      %p372 = pneg %p371
    $region54: #{attention_block.4} parent=5 // pred_check_branch
      %374 = sbr.rel (%p372) target = $region56
    $region55: #{attention_block.4} parent=5 // pred_region
      // Predicated region
      $region57: #{attention_block.4} parent=55 // pred_check
        %p375 = pneg %p54
      $region58: #{attention_block.4} parent=55 // pred_check_branch
        %377 = sbr.rel (%p375) target = $region60
      $region59: #{attention_block.4} parent=55 // pred_region
        %p378 = scmp.lt.s32.totalorder %s27, 1
        %s379 = scalar_select %p378, %s27, 1
        %p380 = scmp.lt.s32.totalorder %s28, 1
        %s381 = scalar_select %p380, %s28, 1
        %s382 = smul.addr %s379, 2
        %s383 = sadd.s32 %s381, %s382
        %s384 = smul.addr %s383, 4
        %s385 = scalar_lea.vmem %s0, %s384
      $region60: #{attention_block.4} parent=55 // pred_fallthru
        _
      // Predicated region
      $region61: #{attention_block.4} parent=55 // pred_check
        %p386 = pneg %p82
      $region62: #{attention_block.4} parent=55 // pred_check_branch
        %388 = sbr.rel (%p386) target = $region64
      $region63: #{attention_block.4} parent=55 // pred_region
        %p389 = scmp.lt.s32.totalorder %s27, 1
        %s390 = scalar_select %p389, %s27, 1
        %p391 = scmp.lt.s32.totalorder %s28, 1
        %s392 = scalar_select %p391, %s28, 1
        %s393 = smul.addr %s390, 2
        %s394 = sadd.s32 %s392, %s393
        %s395 = smul.addr %s394, 4
        %s396 = scalar_lea.vmem %s1, %s395
      $region64: #{attention_block.4} parent=55 // pred_fallthru
        _
    $region56: #{attention_block.4} parent=5 // pred_fallthru
      _
    %p397 = scmp.le.s32.totalorder 1, %s20
    %p398 = scmp.lt.s32.totalorder %s20, 5
    %p399 = pnand %p397, %p398
    %p400 = pneg %p399
    // Predicated region
    $region65: #{attention_block.4} parent=5 // pred_check
      _
    $region66: #{attention_block.4} parent=5 // pred_check_branch
      %402 = sbr.rel (%p399) target = $region68
    $region67: #{attention_block.4} parent=5 // pred_region
      %s403 = ssub.s32 %s20, 1
      %p404 = scmp.lt.s32.totalorder %s29, 1
      %s405 = scalar_select %p404, %s29, 1
      %p406 = scmp.lt.s32.totalorder %s30, 1
      %s407 = scalar_select %p406, %s30, 1
      %s408 = smul.addr %s405, 2
      %s409 = sadd.s32 %s407, %s408
      %s410 = smul.addr %s409, 4
      %s411 = scalar_lea.vmem %s0, %s410
      %p412 = pneg %p60
      %p413 = pneg %p57
      %p414 = scmp.lt.s32.totalorder %s29, 1
      %s415 = scalar_select %p414, %s29, 1
      %p416 = scmp.lt.s32.totalorder %s30, 1
      %s417 = scalar_select %p416, %s30, 1
      %s418 = smul.addr %s415, 2
      %s419 = sadd.s32 %s417, %s418
      %s420 = smul.addr %s419, 4
      %s421 = scalar_lea.vmem %s1, %s420
      %p422 = pneg %p88
      %p423 = pneg %p85
      %p424 = pneg %p109
      %p425 = pneg %p106
      %p426 = pneg %p130
      %p427 = pneg %p127
      %p428 = pneg %p151
      %p429 = pneg %p148
      %p430 = pneg %p172
      %p431 = pneg %p169
      %p432 = pneg %p193
      %p433 = pneg %p190
      %p434 = pneg %p214
      %p435 = pneg %p211
      %p436 = pneg %p235
      %p437 = pneg %p232
      %p438 = pneg %p256
      %p439 = pneg %p253
      %p440 = pneg %p277
      %p441 = pneg %p274
      %p442 = pneg %p298
      %p443 = pneg %p295
      %p444 = pneg %p326
      %p445 = pneg %p323
      %p446 = scmp.lt.s32.totalorder %s29, 1
      %s447 = scalar_select %p446, %s29, 1
      %p448 = scmp.lt.s32.totalorder %s30, 1
      %s449 = scalar_select %p448, %s30, 1
      %s450 = smul.addr %s447, 2
      %s451 = sadd.s32 %s449, %s450
      %s452 = scalar_lea.vmem %s12, %s451
      %p453 = scmp.lt.s32.totalorder %s29, 1
      %s454 = scalar_select %p453, %s29, 1
      %p455 = scmp.lt.s32.totalorder %s30, 1
      %s456 = scalar_select %p455, %s30, 1
      %s457 = smul.addr %s454, 2
      %s458 = sadd.s32 %s456, %s457
      %s459 = smul.addr %s458, 4
      %s460 = scalar_lea.vmem %s0, %s459
      %p461 = scmp.lt.s32.totalorder %s29, 1
      %s462 = scalar_select %p461, %s29, 1
      %p463 = scmp.lt.s32.totalorder %s30, 1
      %s464 = scalar_select %p463, %s30, 1
      %s465 = smul.addr %s462, 2
      %s466 = sadd.s32 %s464, %s465
      %s467 = smul.addr %s466, 4
      %s468 = scalar_lea.vmem %s1, %s467
      %p469 = scmp.lt.s32.totalorder %s29, 1
      %s470 = scalar_select %p469, %s29, 1
      %p471 = scmp.lt.s32.totalorder %s30, 1
      %s472 = scalar_select %p471, %s30, 1
      %s473 = smul.addr %s470, 2
      %s474 = sadd.s32 %s472, %s473
      %s475 = scalar_lea.vmem %s12, %s474
      %v476 = vld [vmem:[%s2] sm:$0xff]
      %v477 = vld [vmem:[%s460] sm:$0xf]
      %v478 = vld [vmem:[%s4] sm:$0xff]
      %480 = vset.pattern.permute.xlu0 0
      %481 = vperm.xlu0 %480, %v478
      %v482 = vpop.permute.xlu0 %481
      %vm484 = vcmask 31744
      %v486 = vsel %vm484, %v476, 0
      %vm488 = vcmask 1043456
      %v490 = vsel %vm488, %v477, 0
      %492 = vmatpush.msra.mxu0 0.0
      %493 = vmatpush.msra.mxu0 0.0
      %494 = vmatpush.msra.mxu0 0.0
      %495 = vmatpush.msra.mxu0 0.0
      %496 = vmatpush.msra.mxu0 0.0
      %497 = vmatpush.msra.mxu0 0.0
      %498 = vmatpush.msra.mxu0 0.0
      %499 = vmatpush.msra.mxu0 0.0
      %500 = vmatpush.msra.mxu0 0.0
      %501 = vmatpush.msra.mxu0 0.0
      %502 = vmatpush.msra.mxu0 0.0
      %503 = vmatpush.msra.mxu0 0.0
      %504 = vmatpush.msra.mxu0 0.0
      %505 = vmatpush.msra.mxu0 0.0
      %506 = vmatpush.msra.mxu0 0.0
      %507 = vmatpush.msra.mxu0 %v490
      %508 = vmatmul.f32.gmra.mxu0 %v486
      %v509 = vpop.f32.mrf.mxu0
      %v510 = vadd.f32 %v482, %v509
      %511 = vdwg.mxu0
      %v512 = vld [vmem:[%s3] sm:$0xff]
      %v513 = vld [vmem:[%s468] sm:$0xf]
      %v514 = vld [vmem:[%s5] sm:$0xff]
      %516 = vset.pattern.permute.xlu0 0
      %517 = vperm.xlu0 %516, %v514
      %v518 = vpop.permute.xlu0 %517
      %v521 = vsel %vm484, %v512, 0
      %v524 = vsel %vm488, %v513, 0
      %526 = vmatpush.msra.mxu0 0.0
      %527 = vmatpush.msra.mxu0 0.0
      %528 = vmatpush.msra.mxu0 0.0
      %529 = vmatpush.msra.mxu0 0.0
      %530 = vmatpush.msra.mxu0 0.0
      %531 = vmatpush.msra.mxu0 0.0
      %532 = vmatpush.msra.mxu0 0.0
      %533 = vmatpush.msra.mxu0 0.0
      %534 = vmatpush.msra.mxu0 0.0
      %535 = vmatpush.msra.mxu0 0.0
      %536 = vmatpush.msra.mxu0 0.0
      %537 = vmatpush.msra.mxu0 0.0
      %538 = vmatpush.msra.mxu0 0.0
      %539 = vmatpush.msra.mxu0 0.0
      %540 = vmatpush.msra.mxu0 0.0
      %541 = vmatpush.msra.mxu0 %v524
      %542 = vmatmul.f32.gmra.mxu0 %v521
      %v543 = vpop.f32.mrf.mxu0
      %v544 = vadd.f32 %v518, %v543
      %545 = vdwg.mxu0
      %v546 = vld [vmem:[%s6] sm:$0xff]
      %548 = vset.pattern.permute.xlu0 0
      %549 = vperm.xlu0 %548, %v546
      %v550 = vpop.permute.xlu0 %549
      %v552 = vmul.f32 %v510, %v550
      %v553 = vld [vmem:[%s7] sm:$0xff]
      %555 = vset.pattern.permute.xlu0 0
      %556 = vperm.xlu0 %555, %v553
      %v557 = vpop.permute.xlu0 %556
      %v559 = vadd.f32 %v552, %v557
      %v560 = vld [vmem:[%s8] sm:$0xff]
      %562 = vset.pattern.permute.xlu0 0
      %563 = vperm.xlu0 %562, %v560
      %v564 = vpop.permute.xlu0 %563
      %v566 = vmul.f32 %v544, %v564
      %v567 = vld [vmem:[%s9] sm:$0xff]
      %569 = vset.pattern.permute.xlu0 0
      %570 = vperm.xlu0 %569, %v567
      %v571 = vpop.permute.xlu0 %570
      %v573 = vadd.f32 %v566, %v571
      %v574 = vadd.f32 %v559, %v573
      %v575 = vmax.f32 %v574, 0.0
      %v576 = vld [vmem:[%s10] sm:$0xff]
      %578 = vset.pattern.permute.xlu0 0
      %579 = vperm.xlu0 %578, %v576
      %v580 = vpop.permute.xlu0 %579
      %v582 = vmul.f32 %v575, %v580
      %v583 = vrot.slane %v582, 4
      %v584 = vadd.f32 %v582, %v583
      %v585 = vrot.slane %v584, 2
      %v586 = vadd.f32 %v584, %v585
      %v587 = vrot.slane %v586, 1
      %v588 = vadd.f32 %v586, %v587
      %v589 = vld [vmem:[#allocation2] sm:$0x1]
      %591 = vset.pattern.permute.xlu0 0
      %592 = vperm.xlu0 %591, %v589
      %v593 = vpop.permute.xlu0 %592
      %v595 = vperm.slane %v593, 0
      %v596 = vadd.f32 %v588, %v595
      %597 = vst [vmem:[%s475] sm:$0x1] %v596
      %p598 = scmp.lt.s32.totalorder %s29, 1
      %s599 = scalar_select %p598, %s29, 1
      %p600 = scmp.lt.s32.totalorder %s30, 1
      %s601 = scalar_select %p600, %s30, 1
      %s602 = smul.addr %s599, 2
      %s603 = sadd.s32 %s601, %s602
      %s604 = scalar_lea.vmem %s12, %s603
      // Predicated region
      $region69: #{attention_block.4} parent=67 // pred_check
        %p605 = pneg %p323
      $region70: #{attention_block.4} parent=67 // pred_check_branch
        %607 = sbr.rel (%p605) target = $region72
      $region71: #{attention_block.4} parent=67 // pred_region
        _
      $region72: #{attention_block.4} parent=67 // pred_fallthru
        _
    $region68: #{attention_block.4} parent=5 // pred_fallthru
      _
    %p608 = scmp.le.s32.totalorder 2, %s20
    // Predicated region
    $region73: #{attention_block.4} parent=5 // pred_check
      %p609 = pneg %p608
    $region74: #{attention_block.4} parent=5 // pred_check_branch
      %611 = sbr.rel (%p609) target = $region76
    $region75: #{attention_block.4} parent=5 // pred_region
      %s612 = ssub.s32 %s20, 2
      // Predicated region
      $region77: #{attention_block.4} parent=75 // pred_check
        %p613 = pneg %p329
      $region78: #{attention_block.4} parent=75 // pred_check_branch
        %615 = sbr.rel (%p613) target = $region80
      $region79: #{attention_block.4} parent=75 // pred_region
        %p616 = scmp.lt.s32.totalorder %s31, 1
        %s617 = scalar_select %p616, %s31, 1
        %p618 = scmp.lt.s32.totalorder %s32, 1
        %s619 = scalar_select %p618, %s32, 1
        %s620 = smul.addr %s617, 2
        %s621 = sadd.s32 %s619, %s620
        %s622 = scalar_lea.vmem %s12, %s621
      $region80: #{attention_block.4} parent=75 // pred_fallthru
        _
    $region76: #{attention_block.4} parent=5 // pred_fallthru
      _
  $region6: #{attention_block.4} parent=0 // loop_footer
    %s24 = sadd.s32 1, %s20
  $region7: #{attention_block.4} parent=0 // loop_footer_branch
    %19 = sbr.rel target = $region3
  $region8: #{attention_block.4} parent=0 // loop_exit
    _

</llo_original>
